<compile_context>
chip_gen: v7x
topology: tpu7x:2x2x1
jax: 0.10.0
libtpu: 0.0.40
codegen_flags: <defaults>
</compile_context>

<pallas_src>
import functools

import jax
import jax.numpy as jnp
from jax.experimental import pallas as pl
from jax.experimental.pallas import tpu as pltpu


def _round_up(x, m):
    return (x + m - 1) // m * m


def _pad2(a, rows, cols):
    return jnp.pad(a, ((0, rows - a.shape[0]), (0, cols - a.shape[1])))


def decoder_kernel(l_valid, x_ref, h_ref, enc_ref,
                   wih_ref, whh_ref, brzn_ref, bhn_ref,
                   wc_ref, bc_ref, wo_ref, bo_ref,
                   logits_ref, hnew_ref, concat_sc):
    """Grid axis j streams contiguous V tiles of the vocab projection.

    l_valid is a static Python int (true encoder length before L padding),
    bound via functools.partial.
    """
    Hp = h_ref.shape[-1]
    j = pl.program_id(0)

    # ---- prologue: GRU + attention + concat, only on the first V tile ----
    @pl.when(j == 0)
    def _prologue():
        cdt = wih_ref.dtype                      # matmul operand dtype (f32/bf16)
        x = x_ref[...]
        h = h_ref[...].astype(jnp.float32)

        # Fused GRU cell (PyTorch gate order r | z | n), 2 MXU matmuls.
        gi = jnp.dot(x.astype(cdt), wih_ref[...],
                     preferred_element_type=jnp.float32) + brzn_ref[...]
        gh = jnp.dot(h.astype(cdt), whh_ref[...],
                     preferred_element_type=jnp.float32)
        r = jax.nn.sigmoid(gi[:, 0:Hp] + gh[:, 0:Hp])
        z = jax.nn.sigmoid(gi[:, Hp:2 * Hp] + gh[:, Hp:2 * Hp])
        n = jnp.tanh(gi[:, 2 * Hp:3 * Hp]
                     + r * (gh[:, 2 * Hp:3 * Hp] + bhn_ref[...]))
        h_new = (1.0 - z) * n + z * h            # rnn_output == new hidden (1 step)
        hnew_ref[...] = h_new

        # Luong "dot" attention — both contractions on the MXU.
        enc = enc_ref[...]                       # (Bp, Lp, Hp)
        edt = enc.dtype
        Lp = enc.shape[1]
        s = jnp.einsum('bqh,blh->bql', h_new[:, None, :].astype(edt), enc,
                       preferred_element_type=jnp.float32)[:, 0, :]   # (Bp, Lp)
        if l_valid < Lp:                         # static: mask padded L positions
            l_idx = jax.lax.broadcasted_iota(jnp.int32, s.shape, 1)
            s = jnp.where(l_idx < l_valid, s, jnp.float32(-1e30))
        s = s - jnp.max(s, axis=-1, keepdims=True)
        e = jnp.exp(s)
        # Prologue runs once per decode step; kernel is HBM-bound on the wo
        # stream, so the exact reciprocal is kept for tighter numerics.
        attn = e * pl.reciprocal(jnp.sum(e, axis=-1, keepdims=True), approx=False)
        ctx = jnp.einsum('bql,blh->bqh', attn[:, None, :].astype(edt), enc,
                         preferred_element_type=jnp.float32)[:, 0, :]  # (Bp, Hp)

        # concat Linear(2H -> H): single fused (Bp,2Hp)x(2Hp,Hp) MXU dot + tanh;
        # kept in scratch so later V tiles reuse it without recompute.
        cat = jnp.concatenate([h_new, ctx], axis=1)                    # (Bp, 2Hp)
        concat_sc[...] = jnp.tanh(
            jnp.dot(cat.astype(cdt), wc_ref[...],
                    preferred_element_type=jnp.float32) + bc_ref[...])

    # ---- per-tile vocab projection (contiguous streamed wo tile) ----
    co = concat_sc[...]
    logits_ref[...] = (
        jnp.dot(co.astype(wo_ref.dtype), wo_ref[...],
                preferred_element_type=jnp.float32) + bo_ref[...])
    # TODO(synk): for greedy decode, compute a per-tile running argmax here
    # instead of emitting the full (Bp, Vp) logits.


def prepare_params(params, *, dtype=jnp.bfloat16, v_tile=2048):
    """One-time weight prep: fuse GRU gates, transpose, pad lane-dense, cast,
    and pre-tile the vocab projection into contiguous (nv, Hp, tile) blocks."""
    H = params["b_concat"].shape[0]
    V = params["w_out"].shape[0]
    Hp = _round_up(H, 128)
    tile = min(v_tile, _round_up(V, 128))        # V tile (multiple of 128)
    Vp = _round_up(V, tile)
    nv = Vp // tile

    w_ih, w_hh = params["w_ih"], params["w_hh"]   # (3H, H)
    b_ih, b_hh = params["b_ih"], params["b_hh"]   # (3H,)

    def gate_t(w, g):                             # (H,H)^T padded -> (Hp, Hp)
        return _pad2(w[g * H:(g + 1) * H, :].T, Hp, Hp)

    wih_t = jnp.concatenate([gate_t(w_ih, g) for g in range(3)], axis=1)  # (Hp,3Hp)
    whh_t = jnp.concatenate([gate_t(w_hh, g) for g in range(3)], axis=1)

    def pad_bias(b):                              # (H,) -> (1, Hp)
        return _pad2(b[None, :], 1, Hp)

    # r/z biases pre-summed; n keeps b_in here and b_hn separate (r * (...) term).
    b_rzn = jnp.concatenate([pad_bias(b_ih[0:H] + b_hh[0:H]),
                             pad_bias(b_ih[H:2 * H] + b_hh[H:2 * H]),
                             pad_bias(b_ih[2 * H:3 * H])], axis=1)        # (1, 3Hp)
    bhn = pad_bias(b_hh[2 * H:3 * H])                                     # (1, Hp)

    wc = params["w_concat"]                       # (H, 2H)
    wc_t = jnp.concatenate([_pad2(wc[:, 0:H].T, Hp, Hp),
                            _pad2(wc[:, H:2 * H].T, Hp, Hp)], axis=0)     # (2Hp, Hp)
    bc = pad_bias(params["b_concat"])

    # Vocab projection: pre-tiled contiguous blocks (one dense DMA per tile).
    wo_t = _pad2(params["w_out"].T, Hp, Vp)                               # (Hp, Vp)
    wo_tiles = wo_t.reshape(Hp, nv, tile).transpose(1, 0, 2)              # (nv, Hp, tile)
    bo = _pad2(params["b_out"][None, :], 1, Vp)                           # (1, Vp)
    bo_tiles = bo.reshape(1, nv, tile).transpose(1, 0, 2)                 # (nv, 1, tile)

    return {
        "embedding": params["embedding"].astype(dtype),
        "wih_t": wih_t.astype(dtype), "whh_t": whh_t.astype(dtype),
        "b_rzn": b_rzn.astype(jnp.float32), "bhn": bhn.astype(jnp.float32),
        "wc_t": wc_t.astype(dtype), "bc": bc.astype(jnp.float32),
        "wo_tiles": wo_tiles.astype(dtype), "bo_tiles": bo_tiles.astype(jnp.float32),
        "H": H, "V": V, "Hp": Hp, "Vp": Vp, "v_tile": tile, "nv": nv, "dtype": dtype,
    }


def prepare_encoder(prep, encoder_outputs):
    """Hoisted once per source sequence (reused across all decode steps):
    transpose to batch-major, pad B->x8, L->x8, H->x128, cast to weight dtype."""
    H, Hp, dt = prep["H"], prep["Hp"], prep["dtype"]
    L, B, _ = encoder_outputs.shape
    Bp = _round_up(B, 8)
    Lp = _round_up(L, 8)
    enc = jnp.zeros((Bp, Lp, Hp), dt).at[:B, :L, :H].set(
        jnp.transpose(encoder_outputs, (1, 0, 2)).astype(dt))
    return enc, L


def luong_decoder_step(prep, input_step, last_hidden, enc, enc_len):
    """One decode step.

    input_step: (1, B) int32, last_hidden: (1, B, H),
    (enc, enc_len): output of prepare_encoder(prep, encoder_outputs).
    Returns (softmax probs (B, V), new hidden (1, B, H)).
    """
    H, V, Hp = prep["H"], prep["V"], prep["Hp"]
    Vp, tile, nv = prep["Vp"], prep["v_tile"], prep["nv"]
    dt = prep["dtype"]
    B = input_step.shape[1]
    Bp, Lp = enc.shape[0], enc.shape[1]

    emb = prep["embedding"][input_step[0]]                         # (B, H)
    # TODO(synk): embedding_dropout (p=0.1) treated as eval-mode identity.
    x = jnp.zeros((Bp, Hp), dt).at[:B, :H].set(emb.astype(dt))
    h0 = jnp.zeros((Bp, Hp), jnp.float32).at[:B, :H].set(last_hidden[0])

    const2 = lambda j: (0, 0)
    const3 = lambda j: (0, 0, 0)
    inv = pl.Buffered(1)                 # invariant blocks: single VMEM buffer
    wo_bufs = 3 if nv >= 3 else 2        # deeper buffering only if it can help
    stream = pl.Buffered(wo_bufs)

    # Explicit scoped-VMEM budget: invariant single-buffered + streamed tiles.
    dsz = jnp.dtype(dt).itemsize
    est = (Bp * Hp * dsz + Bp * Hp * 4 + Bp * Lp * Hp * dsz           # x, h, enc
           + 2 * Hp * 3 * Hp * dsz + 8 * 3 * Hp * 4 + 8 * Hp * 4      # wih, whh, gru biases
           + 2 * Hp * Hp * dsz + 8 * Hp * 4                           # wc, bc
           + wo_bufs * (Hp * tile * dsz + 8 * tile * 4)               # wo/bo tiles
           + 2 * Bp * tile * 4 + 2 * Bp * Hp * 4 + Bp * Hp * 4)       # logits, hnew, scratch
    vmem_limit = int(min(max(2 * est + (4 << 20), 32 << 20), 64 << 20))

    logits, h_new = pl.pallas_call(
        functools.partial(decoder_kernel, enc_len),
        out_shape=(jax.ShapeDtypeStruct((Bp, Vp), jnp.float32),
                   jax.ShapeDtypeStruct((Bp, Hp), jnp.float32)),
        grid=(nv,),
        in_specs=[
            pl.BlockSpec((Bp, Hp), const2, pipeline_mode=inv),        # x (embedded input)
            pl.BlockSpec((Bp, Hp), const2, pipeline_mode=inv),        # previous hidden
            pl.BlockSpec((Bp, Lp, Hp), const3, pipeline_mode=inv),    # encoder outputs
            pl.BlockSpec((Hp, 3 * Hp), const2, pipeline_mode=inv),    # fused W_ih^T
            pl.BlockSpec((Hp, 3 * Hp), const2, pipeline_mode=inv),    # fused W_hh^T
            pl.BlockSpec((1, 3 * Hp), const2, pipeline_mode=inv),     # packed r/z/n biases
            pl.BlockSpec((1, Hp), const2, pipeline_mode=inv),         # b_hn
            pl.BlockSpec((2 * Hp, Hp), const2, pipeline_mode=inv),    # concat W^T
            pl.BlockSpec((1, Hp), const2, pipeline_mode=inv),         # concat bias
            pl.BlockSpec((None, Hp, tile), lambda j: (j, 0, 0),       # W_out^T tile j (contiguous)
                         pipeline_mode=stream),
            pl.BlockSpec((None, 1, tile), lambda j: (j, 0, 0),        # b_out tile j
                         pipeline_mode=stream),
        ],
        out_specs=(pl.BlockSpec((Bp, tile), lambda j: (0, j)),        # logits tile
                   pl.BlockSpec((Bp, Hp), const2)),                   # new hidden
        scratch_shapes=[pltpu.VMEM((Bp, Hp), jnp.float32)],           # concat_out
        compiler_params=pltpu.CompilerParams(
            dimension_semantics=("arbitrary",),
            vmem_limit_bytes=vmem_limit),
    )(x, h0, enc, prep["wih_t"], prep["whh_t"], prep["b_rzn"], prep["bhn"],
      prep["wc_t"], prep["bc"], prep["wo_tiles"], prep["bo_tiles"])

    # Vocab softmax on the valid slice (cheap; keeps V-tiling correct).
    probs = jax.nn.softmax(logits[:B, :V], axis=-1)
    return probs, h_new[:B, :H][None]                             # hidden: (1, B, H)


def reference_step(params, input_step, last_hidden, encoder_outputs):
    """Pure-JAX reference mirroring the PyTorch forward (eval mode)."""
    H = params["b_concat"].shape[0]
    emb = params["embedding"][input_step[0]]
    h = last_hidden[0]
    gi = emb @ params["w_ih"].T + params["b_ih"]
    gh = h @ params["w_hh"].T + params["b_hh"]
    r = jax.nn.sigmoid(gi[:, 0:H] + gh[:, 0:H])
    z = jax.nn.sigmoid(gi[:, H:2 * H] + gh[:, H:2 * H])
    n = jnp.tanh(gi[:, 2 * H:] + r * gh[:, 2 * H:])
    h_new = (1 - z) * n + z * h                                    # (B, H)
    scores = jnp.sum(h_new[None, :, :] * encoder_outputs, axis=2)  # (L, B)
    attn = jax.nn.softmax(scores.T, axis=1)                        # (B, L)
    context = jnp.einsum("bl,lbh->bh", attn, encoder_outputs)
    concat_in = jnp.concatenate([h_new, context], axis=1)
    concat_out = jnp.tanh(concat_in @ params["w_concat"].T + params["b_concat"])
    out = jax.nn.softmax(concat_out @ params["w_out"].T + params["b_out"], axis=1)
    return out, h_new[None]


if __name__ == "__main__":
    # L=7 (not a multiple of 8) exercises the L-padding + attention-mask path.
    B, H, L, V = 2, 32, 7, 64   # batch, hidden_size, encoder seq len, vocab size

    key = jax.random.PRNGKey(0)
    ks = jax.random.split(key, 12)
    scale = 0.1
    params = {
        "embedding": scale * jax.random.normal(ks[0], (V, H), jnp.float32),
        "w_ih":      scale * jax.random.normal(ks[1], (3 * H, H), jnp.float32),
        "w_hh":      scale * jax.random.normal(ks[2], (3 * H, H), jnp.float32),
        "b_ih":      scale * jax.random.normal(ks[3], (3 * H,), jnp.float32),
        "b_hh":      scale * jax.random.normal(ks[4], (3 * H,), jnp.float32),
        "w_concat":  scale * jax.random.normal(ks[5], (H, 2 * H), jnp.float32),
        "b_concat":  scale * jax.random.normal(ks[6], (H,), jnp.float32),
        "w_out":     scale * jax.random.normal(ks[7], (V, H), jnp.float32),
        "b_out":     scale * jax.random.normal(ks[8], (V,), jnp.float32),
    }

    input_step = jax.random.randint(ks[9], (1, B), 0, V, jnp.int32)          # (1, B)
    last_hidden = scale * jax.random.normal(ks[10], (1, B, H), jnp.float32)  # (1, B, H)
    encoder_outputs = scale * jax.random.normal(ks[11], (L, B, H), jnp.float32)

    ref_out, ref_hidden = reference_step(params, input_step, last_hidden,
                                         encoder_outputs)

    # ---- f32 path (exact check against the reference) ----
    prep32 = prepare_params(params, dtype=jnp.float32)
    enc32, enc_len = prepare_encoder(prep32, encoder_outputs)   # once per sequence
    out, hidden = jax.block_until_ready(
        luong_decoder_step(prep32, input_step, last_hidden, enc32, enc_len))
    assert out.shape == (B, V) and hidden.shape == (1, B, H)
    assert jnp.allclose(out, ref_out, atol=1e-5, rtol=1e-5)
    assert jnp.allclose(hidden, ref_hidden, atol=1e-5, rtol=1e-5)
    assert jnp.allclose(jnp.sum(out, axis=1), 1.0, atol=1e-5)

    # ---- bf16-weight default path (production setting), f32 accumulation ----
    prep16 = prepare_params(params)                              # dtype=bf16 default
    enc16, enc_len16 = prepare_encoder(prep16, encoder_outputs)
    out16, hidden16 = jax.block_until_ready(
        luong_decoder_step(prep16, input_step, last_hidden, enc16, enc_len16))
    assert out16.shape == (B, V) and hidden16.shape == (1, B, H)
    assert jnp.allclose(out16, ref_out, atol=2e-2)
    assert jnp.allclose(hidden16, ref_hidden, atol=2e-2)

    print("KERNEL_OK")
</pallas_src>

<mosaic_0001>
module attributes {stable_mosaic.version = 11 : i64} {
  func.func @decoder_kernel(%arg0: i32, %arg1: memref<8x128xf32, #tpu.memory_space<vmem>>, %arg2: memref<8x128xf32, #tpu.memory_space<vmem>>, %arg3: memref<8x8x128xf32, #tpu.memory_space<vmem>>, %arg4: memref<128x384xf32, #tpu.memory_space<vmem>>, %arg5: memref<128x384xf32, #tpu.memory_space<vmem>>, %arg6: memref<1x384xf32, #tpu.memory_space<vmem>>, %arg7: memref<1x128xf32, #tpu.memory_space<vmem>>, %arg8: memref<256x128xf32, #tpu.memory_space<vmem>>, %arg9: memref<1x128xf32, #tpu.memory_space<vmem>>, %arg10: memref<1x128x128xf32, #tpu.memory_space<vmem>>, %arg11: memref<1x1x128xf32, #tpu.memory_space<vmem>>, %arg12: memref<8x128xf32, #tpu.memory_space<vmem>>, %arg13: memref<8x128xf32, #tpu.memory_space<vmem>>, %arg14: memref<8x128xf32, #tpu.memory_space<vmem>>) attributes {dimension_semantics = [#tpu.dimension_semantics<arbitrary>], iteration_bounds = array<i64: 1>, scalar_prefetch = 0 : i64, scratch_operands = 1 : i64, tpu.core_type = #tpu.core_type<tc>, window_params = [{pipeline_mode = #tpu.pipeline_mode<synchronous>, transform_indices = @transform_0, window_bounds = array<i64: 8, 128>}, {pipeline_mode = #tpu.pipeline_mode<synchronous>, transform_indices = @transform_1, window_bounds = array<i64: 8, 128>}, {pipeline_mode = #tpu.pipeline_mode<synchronous>, transform_indices = @transform_2, window_bounds = array<i64: 8, 8, 128>}, {pipeline_mode = #tpu.pipeline_mode<synchronous>, transform_indices = @transform_3, window_bounds = array<i64: 128, 384>}, {pipeline_mode = #tpu.pipeline_mode<synchronous>, transform_indices = @transform_4, window_bounds = array<i64: 128, 384>}, {pipeline_mode = #tpu.pipeline_mode<synchronous>, transform_indices = @transform_5, window_bounds = array<i64: 1, 384>}, {pipeline_mode = #tpu.pipeline_mode<synchronous>, transform_indices = @transform_6, window_bounds = array<i64: 1, 128>}, {pipeline_mode = #tpu.pipeline_mode<synchronous>, transform_indices = @transform_7, window_bounds = array<i64: 256, 128>}, {pipeline_mode = #tpu.pipeline_mode<synchronous>, transform_indices = @transform_8, window_bounds = array<i64: 1, 128>}, {pipeline_mode = #tpu.pipeline_mode<double_buffered>, transform_indices = @transform_9, window_bounds = array<i64: 1, 128, 128>}, {pipeline_mode = #tpu.pipeline_mode<double_buffered>, transform_indices = @transform_10, window_bounds = array<i64: 1, 1, 128>}, {transform_indices = @transform_11, window_bounds = array<i64: 8, 128>}, {pipeline_mode = #tpu.pipeline_mode<synchronous>, transform_indices = @transform_12, window_bounds = array<i64: 8, 128>}]} {
    %c0_i32 = arith.constant 0 : i32
    %0 = arith.cmpi eq, %arg0, %c0_i32 : i32
    %1 = arith.extui %0 : i1 to i32
    %c0_i32_0 = arith.constant 0 : i32
    %2 = arith.cmpi ne, %1, %c0_i32_0 : i32
    scf.if %2 {
      %c0_10 = arith.constant 0 : index
      %c0_11 = arith.constant 0 : index
      %12 = vector.load %arg1[%c0_10, %c0_11] : memref<8x128xf32, #tpu.memory_space<vmem>>, vector<8x128xf32>
      %c0_12 = arith.constant 0 : index
      %c0_13 = arith.constant 0 : index
      %13 = vector.load %arg2[%c0_12, %c0_13] : memref<8x128xf32, #tpu.memory_space<vmem>>, vector<8x128xf32>
      %c0_14 = arith.constant 0 : index
      %c0_15 = arith.constant 0 : index
      %14 = vector.load %arg4[%c0_14, %c0_15] : memref<128x384xf32, #tpu.memory_space<vmem>>, vector<128x384xf32>
      %cst_16 = arith.constant dense<0.000000e+00> : vector<8x384xf32>
      %15 = tpu.matmul %12, %14, %cst_16 {dimension_numbers = #tpu.dot_dimension_numbers<[1], [0], [0], [1], [0, 0, 1, 1], [], []>} : vector<8x128xf32>, vector<128x384xf32>, vector<8x384xf32> -> vector<8x384xf32>
      %c0_17 = arith.constant 0 : index
      %c0_18 = arith.constant 0 : index
      %16 = vector.load %arg6[%c0_17, %c0_18] : memref<1x384xf32, #tpu.memory_space<vmem>>, vector<1x384xf32>
      %17 = vector.broadcast %16 : vector<1x384xf32> to vector<8x384xf32>
      %18 = arith.addf %15, %17 : vector<8x384xf32>
      %c0_19 = arith.constant 0 : index
      %c0_20 = arith.constant 0 : index
      %19 = vector.load %arg5[%c0_19, %c0_20] : memref<128x384xf32, #tpu.memory_space<vmem>>, vector<128x384xf32>
      %cst_21 = arith.constant dense<0.000000e+00> : vector<8x384xf32>
      %20 = tpu.matmul %13, %19, %cst_21 {dimension_numbers = #tpu.dot_dimension_numbers<[1], [0], [0], [1], [0, 0, 1, 1], [], []>} : vector<8x128xf32>, vector<128x384xf32>, vector<8x384xf32> -> vector<8x384xf32>
      %21 = vector.extract_strided_slice %18 {offsets = [0, 0], sizes = [8, 128], strides = [1, 1]} : vector<8x384xf32> to vector<8x128xf32>
      %22 = vector.extract_strided_slice %20 {offsets = [0, 0], sizes = [8, 128], strides = [1, 1]} : vector<8x384xf32> to vector<8x128xf32>
      %23 = arith.addf %21, %22 : vector<8x128xf32>
      %24 = arith.negf %23 : vector<8x128xf32>
      %25 = math.exp %24 : vector<8x128xf32>
      %cst_22 = arith.constant 1.000000e+00 : f32
      %26 = vector.broadcast %cst_22 : f32 to vector<8x128xf32>
      %27 = arith.addf %26, %25 : vector<8x128xf32>
      %28 = arith.divf %26, %27 : vector<8x128xf32>
      %29 = vector.extract_strided_slice %18 {offsets = [0, 128], sizes = [8, 128], strides = [1, 1]} : vector<8x384xf32> to vector<8x128xf32>
      %30 = vector.extract_strided_slice %20 {offsets = [0, 128], sizes = [8, 128], strides = [1, 1]} : vector<8x384xf32> to vector<8x128xf32>
      %31 = arith.addf %29, %30 : vector<8x128xf32>
      %32 = arith.negf %31 : vector<8x128xf32>
      %33 = math.exp %32 : vector<8x128xf32>
      %cst_23 = arith.constant 1.000000e+00 : f32
      %34 = vector.broadcast %cst_23 : f32 to vector<8x128xf32>
      %35 = arith.addf %34, %33 : vector<8x128xf32>
      %36 = arith.divf %34, %35 : vector<8x128xf32>
      %37 = vector.extract_strided_slice %18 {offsets = [0, 256], sizes = [8, 128], strides = [1, 1]} : vector<8x384xf32> to vector<8x128xf32>
      %38 = vector.extract_strided_slice %20 {offsets = [0, 256], sizes = [8, 128], strides = [1, 1]} : vector<8x384xf32> to vector<8x128xf32>
      %c0_24 = arith.constant 0 : index
      %c0_25 = arith.constant 0 : index
      %39 = vector.load %arg7[%c0_24, %c0_25] : memref<1x128xf32, #tpu.memory_space<vmem>>, vector<1x128xf32>
      %40 = vector.broadcast %39 : vector<1x128xf32> to vector<8x128xf32>
      %41 = arith.addf %38, %40 : vector<8x128xf32>
      %42 = arith.mulf %28, %41 : vector<8x128xf32>
      %43 = arith.addf %37, %42 : vector<8x128xf32>
      %44 = math.tanh %43 : vector<8x128xf32>
      %cst_26 = arith.constant 1.000000e+00 : f32
      %45 = vector.broadcast %cst_26 : f32 to vector<8x128xf32>
      %46 = arith.subf %45, %36 : vector<8x128xf32>
      %47 = arith.mulf %46, %44 : vector<8x128xf32>
      %48 = arith.mulf %36, %13 : vector<8x128xf32>
      %49 = arith.addf %47, %48 : vector<8x128xf32>
      %c0_27 = arith.constant 0 : index
      %c0_28 = arith.constant 0 : index
      %50 = vector.load %arg13[%c0_27, %c0_28] : memref<8x128xf32, #tpu.memory_space<vmem>>, vector<8x128xf32>
      tpu.vector_store %arg13[%c0_27, %c0_28], %49 {strides = array<i32>} : memref<8x128xf32, #tpu.memory_space<vmem>>, vector<8x128xf32>,
      %c0_29 = arith.constant 0 : index
      %c0_30 = arith.constant 0 : index
      %c0_31 = arith.constant 0 : index
      %51 = vector.load %arg3[%c0_29, %c0_30, %c0_31] : memref<8x8x128xf32, #tpu.memory_space<vmem>>, vector<8x8x128xf32>
      %52 = vector.shape_cast %49 : vector<8x128xf32> to vector<8x1x128xf32>
      "tpu.trace_start"() <{level = 10 : i32, message = "bqh,blh->bql"}> : () -> ()
      %cst_32 = arith.constant dense<0.000000e+00> : vector<8x1x8xf32>
      %53 = tpu.matmul %52, %51, %cst_32 {dimension_numbers = #tpu.dot_dimension_numbers<[2], [2], [1], [1], [0, 0, 0, 1, 1, 1], [0], [0]>} : vector<8x1x128xf32>, vector<8x8x128xf32>, vector<8x1x8xf32> -> vector<8x1x8xf32>
      "tpu.trace_stop"() : () -> ()
      %54 = vector.shape_cast %53 : vector<8x1x8xf32> to vector<8x8xf32>
      %55 = tpu.iota {dimensions = array<i32: 1>} : vector<8x8xi32>
      %c7_i32 = arith.constant 7 : i32
      %56 = vector.broadcast %c7_i32 : i32 to vector<8x8xi32>
      %57 = arith.cmpi slt, %55, %56 : vector<8x8xi32>
      %cst_33 = arith.constant -1.000000e+30 : f32
      %58 = vector.broadcast %cst_33 : f32 to vector<8x8xf32>
      %59 = arith.select %57, %54, %58 : vector<8x8xi1>, vector<8x8xf32>
      %cst_34 = arith.constant dense<0xFF800000> : vector<8xf32>
      %60 = vector.multi_reduction <maximumf>, %59, %cst_34 [1] : vector<8x8xf32> to vector<8xf32>
      %61 = vector.shape_cast %60 : vector<8xf32> to vector<8x1xf32>
      %62 = vector.broadcast %61 : vector<8x1xf32> to vector<8x8xf32>
      %63 = arith.subf %59, %62 : vector<8x8xf32>
      %64 = math.exp %63 : vector<8x8xf32>
      %cst_35 = arith.constant dense<0.000000e+00> : vector<8xf32>
      %65 = vector.multi_reduction <add>, %64, %cst_35 [1] : vector<8x8xf32> to vector<8xf32>
      %66 = vector.shape_cast %65 : vector<8xf32> to vector<8x1xf32>
      %67 = tpu.reciprocal %66 : vector<8x1xf32> -> vector<8x1xf32>
      %68 = vector.broadcast %67 : vector<8x1xf32> to vector<8x8xf32>
      %69 = arith.mulf %64, %68 : vector<8x8xf32>
      %70 = vector.shape_cast %69 : vector<8x8xf32> to vector<8x1x8xf32>
      "tpu.trace_start"() <{level = 10 : i32, message = "bql,blh->bqh"}> : () -> ()
      %cst_36 = arith.constant dense<0.000000e+00> : vector<8x1x128xf32>
      %71 = tpu.matmul %70, %51, %cst_36 {dimension_numbers = #tpu.dot_dimension_numbers<[2], [1], [1], [2], [0, 0, 0, 1, 1, 2], [0], [0]>} : vector<8x1x8xf32>, vector<8x8x128xf32>, vector<8x1x128xf32> -> vector<8x1x128xf32>
      "tpu.trace_stop"() : () -> ()
      %72 = vector.shape_cast %71 : vector<8x1x128xf32> to vector<8x128xf32>
      %73 = tpu.concatenate %49, %72 in 1 : vector<8x128xf32>, vector<8x128xf32> -> vector<8x256xf32>
      %c0_37 = arith.constant 0 : index
      %c0_38 = arith.constant 0 : index
      %74 = vector.load %arg8[%c0_37, %c0_38] : memref<256x128xf32, #tpu.memory_space<vmem>>, vector<256x128xf32>
      %cst_39 = arith.constant dense<0.000000e+00> : vector<8x128xf32>
      %75 = tpu.matmul %73, %74, %cst_39 {dimension_numbers = #tpu.dot_dimension_numbers<[1], [0], [0], [1], [0, 0, 1, 1], [], []>} : vector<8x256xf32>, vector<256x128xf32>, vector<8x128xf32> -> vector<8x128xf32>
      %c0_40 = arith.constant 0 : index
      %c0_41 = arith.constant 0 : index
      %76 = vector.load %arg9[%c0_40, %c0_41] : memref<1x128xf32, #tpu.memory_space<vmem>>, vector<1x128xf32>
      %77 = vector.broadcast %76 : vector<1x128xf32> to vector<8x128xf32>
      %78 = arith.addf %75, %77 : vector<8x128xf32>
      %79 = math.tanh %78 : vector<8x128xf32>
      %c0_42 = arith.constant 0 : index
      %c0_43 = arith.constant 0 : index
      %80 = vector.load %arg14[%c0_42, %c0_43] : memref<8x128xf32, #tpu.memory_space<vmem>>, vector<8x128xf32>
      tpu.vector_store %arg14[%c0_42, %c0_43], %79 {strides = array<i32>} : memref<8x128xf32, #tpu.memory_space<vmem>>, vector<8x128xf32>,
    } else {
    }
    %c0 = arith.constant 0 : index
    %c0_1 = arith.constant 0 : index
    %3 = vector.load %arg14[%c0, %c0_1] : memref<8x128xf32, #tpu.memory_space<vmem>>, vector<8x128xf32>
    %c0_2 = arith.constant 0 : index
    %c0_3 = arith.constant 0 : index
    %c0_4 = arith.constant 0 : index
    %4 = vector.load %arg10[%c0_2, %c0_3, %c0_4] : memref<1x128x128xf32, #tpu.memory_space<vmem>>, vector<1x128x128xf32>
    %5 = vector.shape_cast %4 : vector<1x128x128xf32> to vector<128x128xf32>
    %cst = arith.constant dense<0.000000e+00> : vector<8x128xf32>
    %6 = tpu.matmul %3, %5, %cst {dimension_numbers = #tpu.dot_dimension_numbers<[1], [0], [0], [1], [0, 0, 1, 1], [], []>} : vector<8x128xf32>, vector<128x128xf32>, vector<8x128xf32> -> vector<8x128xf32>
    %c0_5 = arith.constant 0 : index
    %c0_6 = arith.constant 0 : index
    %c0_7 = arith.constant 0 : index
    %7 = vector.load %arg11[%c0_5, %c0_6, %c0_7] : memref<1x1x128xf32, #tpu.memory_space<vmem>>, vector<1x1x128xf32>
    %8 = vector.shape_cast %7 : vector<1x1x128xf32> to vector<1x128xf32>
    %9 = vector.broadcast %8 : vector<1x128xf32> to vector<8x128xf32>
    %10 = arith.addf %6, %9 : vector<8x128xf32>
    %c0_8 = arith.constant 0 : index
    %c0_9 = arith.constant 0 : index
    %11 = vector.load %arg12[%c0_8, %c0_9] : memref<8x128xf32, #tpu.memory_space<vmem>>, vector<8x128xf32>
    tpu.vector_store %arg12[%c0_8, %c0_9], %10 {strides = array<i32>} : memref<8x128xf32, #tpu.memory_space<vmem>>, vector<8x128xf32>,
    return
  }
  func.func @transform_0(%arg0: i32) -> (i32, i32) {
    %c0_i32 = arith.constant 0 : i32
    %c0_i32_0 = arith.constant 0 : i32
    %c0_i32_1 = arith.constant 0 : i32
    return %c0_i32, %c0_i32_0 : i32, i32
  }
  func.func @transform_1(%arg0: i32) -> (i32, i32) {
    %c0_i32 = arith.constant 0 : i32
    %c0_i32_0 = arith.constant 0 : i32
    %c0_i32_1 = arith.constant 0 : i32
    return %c0_i32, %c0_i32_0 : i32, i32
  }
  func.func @transform_2(%arg0: i32) -> (i32, i32, i32) {
    %c0_i32 = arith.constant 0 : i32
    %c0_i32_0 = arith.constant 0 : i32
    %c0_i32_1 = arith.constant 0 : i32
    %c0_i32_2 = arith.constant 0 : i32
    return %c0_i32, %c0_i32_0, %c0_i32_1 : i32, i32, i32
  }
  func.func @transform_3(%arg0: i32) -> (i32, i32) {
    %c0_i32 = arith.constant 0 : i32
    %c0_i32_0 = arith.constant 0 : i32
    %c0_i32_1 = arith.constant 0 : i32
    return %c0_i32, %c0_i32_0 : i32, i32
  }
  func.func @transform_4(%arg0: i32) -> (i32, i32) {
    %c0_i32 = arith.constant 0 : i32
    %c0_i32_0 = arith.constant 0 : i32
    %c0_i32_1 = arith.constant 0 : i32
    return %c0_i32, %c0_i32_0 : i32, i32
  }
  func.func @transform_5(%arg0: i32) -> (i32, i32) {
    %c0_i32 = arith.constant 0 : i32
    %c0_i32_0 = arith.constant 0 : i32
    %c0_i32_1 = arith.constant 0 : i32
    return %c0_i32, %c0_i32_0 : i32, i32
  }
  func.func @transform_6(%arg0: i32) -> (i32, i32) {
    %c0_i32 = arith.constant 0 : i32
    %c0_i32_0 = arith.constant 0 : i32
    %c0_i32_1 = arith.constant 0 : i32
    return %c0_i32, %c0_i32_0 : i32, i32
  }
  func.func @transform_7(%arg0: i32) -> (i32, i32) {
    %c0_i32 = arith.constant 0 : i32
    %c0_i32_0 = arith.constant 0 : i32
    %c0_i32_1 = arith.constant 0 : i32
    return %c0_i32, %c0_i32_0 : i32, i32
  }
  func.func @transform_8(%arg0: i32) -> (i32, i32) {
    %c0_i32 = arith.constant 0 : i32
    %c0_i32_0 = arith.constant 0 : i32
    %c0_i32_1 = arith.constant 0 : i32
    return %c0_i32, %c0_i32_0 : i32, i32
  }
  func.func @transform_9(%arg0: i32) -> (i32, i32, i32) {
    %c0_i32 = arith.constant 0 : i32
    %c0_i32_0 = arith.constant 0 : i32
    %c0_i32_1 = arith.constant 0 : i32
    return %arg0, %c0_i32, %c0_i32_0 : i32, i32, i32
  }
  func.func @transform_10(%arg0: i32) -> (i32, i32, i32) {
    %c0_i32 = arith.constant 0 : i32
    %c0_i32_0 = arith.constant 0 : i32
    %c0_i32_1 = arith.constant 0 : i32
    return %arg0, %c0_i32, %c0_i32_0 : i32, i32, i32
  }
  func.func @transform_11(%arg0: i32) -> (i32, i32) {
    %c0_i32 = arith.constant 0 : i32
    %c0_i32_0 = arith.constant 0 : i32
    return %c0_i32, %arg0 : i32, i32
  }
  func.func @transform_12(%arg0: i32) -> (i32, i32) {
    %c0_i32 = arith.constant 0 : i32
    %c0_i32_0 = arith.constant 0 : i32
    %c0_i32_1 = arith.constant 0 : i32
    return %c0_i32, %c0_i32_0 : i32, i32
  }
}

</mosaic_0001>

<llo_original>
// kernel: tpu_custom_call.1
$region0: #{tpu_custom_call.1}
  #allocation0 [shape = 'u32[]', space=smem, size = 0x4, offset = 0x4, fixed_abs, tag = 'smem constant byte address 0x4 - core index']
  #allocation1 [shape = 'u32[144,128]{1,0:T(1,128)}', space=vmem, size = 0x12000, scoped, tag = 'internal scratch']
  #allocation2 [shape = 'f32[8,128]{1,0:T(8,128)}', space=vmem, size = 0x1000, scoped, tag = 'scratch operand']
  %s0 = inlined_call_operand.hbm [shape: f32[8,128], index: 0, kind: input, shape index: {}]
  %s1 = inlined_call_operand.hbm [shape: f32[8,128], index: 1, kind: input, shape index: {}]
  %s2 = inlined_call_operand.hbm [shape: f32[8,8,128], index: 2, kind: input, shape index: {}]
  %s3 = inlined_call_operand.hbm [shape: f32[128,384], index: 3, kind: input, shape index: {}]
  %s4 = inlined_call_operand.hbm [shape: f32[128,384], index: 4, kind: input, shape index: {}]
  %s5 = inlined_call_operand.vmem [shape: f32[1,384], index: 5, kind: input, shape index: {}]
  %s6 = inlined_call_operand.vmem [shape: f32[1,128], index: 6, kind: input, shape index: {}]
  %s7 = inlined_call_operand.hbm [shape: f32[256,128], index: 7, kind: input, shape index: {}]
  %s8 = inlined_call_operand.vmem [shape: f32[1,128], index: 8, kind: input, shape index: {}]
  %s9 = inlined_call_operand.hbm [shape: f32[1,128,128], index: 9, kind: input, shape index: {}]
  %s10 = inlined_call_operand.vmem [shape: f32[1,1,128], index: 10, kind: input, shape index: {}]
  %s11 = inlined_call_operand.hbm [shape: f32[8,128], index: 11, kind: output, shape index: {0}]
  %s12 = inlined_call_operand.hbm [shape: f32[8,128], index: 12, kind: output, shape index: {1}]
  %13 = xla_tuple %s11, %s12
  %s14 = sld [smem:[#allocation0]]
  $region94: #{tpu_custom_call.1} parent=0
    _
  %s16 = ssub.s32 1, %s14
  %s17 = scalar_select 0, %s16, %s14
  $region1: #{tpu_custom_call.1} parent=0
    #allocation3 [shape = 'u8[4096]{0}', space=vmem, size = 0x1000, scoped, tag = 'input window, operand 0, single buffered']
    #allocation4 [shape = 's32[1]{0}', space=sflag, size = 0x4, scoped, tag = 'scoped memory for tpu_custom_call.1']
    #allocation5 [shape = 's32[1]{0}', space=sflag, size = 0x4, scoped, tag = 'scoped memory for tpu_custom_call.1']
    #allocation6 [shape = 'u8[4096]{0}', space=vmem, size = 0x1000, scoped, tag = 'input window, operand 1, single buffered']
    #allocation7 [shape = 's32[1]{0}', space=sflag, size = 0x4, scoped, tag = 'scoped memory for tpu_custom_call.1']
    #allocation8 [shape = 'u8[32768]{0}', space=vmem, size = 0x8000, scoped, tag = 'input window, operand 2, single buffered']
    #allocation9 [shape = 'u8[196608]{0}', space=vmem, size = 0x30000, scoped, tag = 'input window, operand 3, single buffered']
    #allocation10 [shape = 's32[1]{0}', space=sflag, size = 0x4, scoped, tag = 'scoped memory for tpu_custom_call.1']
    #allocation11 [shape = 'u8[196608]{0}', space=vmem, size = 0x30000, scoped, tag = 'input window, operand 4, single buffered']
    #allocation12 [shape = 'u8[131072]{0}', space=vmem, size = 0x20000, scoped, tag = 'input window, operand 7, single buffered']
    #allocation13 [shape = 's32[1]{0}', space=sflag, size = 0x4, scoped, tag = 'scoped memory for tpu_custom_call.1']
    #allocation14 [shape = 'u8[65536]{0}', space=vmem, size = 0x10000, scoped, tag = 'input window, operand 9, single buffered']
    #allocation15 [shape = 'u8[4096]{0}', space=vmem, size = 0x1000, scoped, tag = 'output window, operand 0, single buffered']
    #allocation16 [shape = 'u8[4096]{0}', space=vmem, size = 0x1000, scoped, tag = 'output window, operand 1, single buffered']
    #allocation17 [shape = 's32[1]{0}', space=sflag, size = 0x4, scoped, tag = 'scoped memory for tpu_custom_call.1']
    %18 = vsyncpa [#allocation4], 0
    %19 = vsyncpa [#allocation7], 0
    %20 = vsyncpa [#allocation10], 0
    %21 = vsyncpa [#allocation13], 0
    %22 = vsyncpa [#allocation5], 0
    %23 = vsyncpa [#allocation17], 0
    // Predicated region
    $region2: #{tpu_custom_call.1} parent=1 // pred_check
      _
    $region3: #{tpu_custom_call.1} parent=1 // pred_check_branch
      %25 = sbr.rel (0) target = $region5
    $region4: #{tpu_custom_call.1} parent=1 // pred_region
      %s27 = ssub.s32 128, 128
      %28 = vsyncadd [#allocation4], %s27
      %s30 = sshll.u32 [#allocation3], 4
      %s31 = int_to_ptr.vmem [resolvable:$true] %s30
      %33 = dma.hbm_to_vmem [thread:$0]  %s0, 128, %s31, [#allocation4]
    $region5: #{tpu_custom_call.1} parent=1 // pred_fallthru
      _
    // Predicated region
    $region6: #{tpu_custom_call.1} parent=1 // pred_check
      _
    $region7: #{tpu_custom_call.1} parent=1 // pred_check_branch
      %35 = sbr.rel (0) target = $region9
    $region8: #{tpu_custom_call.1} parent=1 // pred_region
      %s37 = ssub.s32 128, 128
      %38 = vsyncadd [#allocation7], %s37
      %s40 = sshll.u32 [#allocation6], 4
      %s41 = int_to_ptr.vmem [resolvable:$true] %s40
      %43 = dma.hbm_to_vmem [thread:$0]  %s1, 128, %s41, [#allocation7]
    $region9: #{tpu_custom_call.1} parent=1 // pred_fallthru
      _
    // Predicated region
    $region10: #{tpu_custom_call.1} parent=1 // pred_check
      _
    $region11: #{tpu_custom_call.1} parent=1 // pred_check_branch
      %45 = sbr.rel (0) target = $region13
    $region12: #{tpu_custom_call.1} parent=1 // pred_region
      %s47 = ssub.s32 1024, 1024
      %48 = vsyncadd [#allocation7], %s47
      %s49 = sshll.u32 [#allocation8], 4
      %s50 = int_to_ptr.vmem [resolvable:$true] %s49
      %55 = dma.hbm_to_vmem [thread:$0]  %s2, 1024, %s50, [#allocation7], 128, 128, 8
    $region13: #{tpu_custom_call.1} parent=1 // pred_fallthru
      _
    // Predicated region
    $region14: #{tpu_custom_call.1} parent=1 // pred_check
      _
    $region15: #{tpu_custom_call.1} parent=1 // pred_check_branch
      %57 = sbr.rel (0) target = $region17
    $region16: #{tpu_custom_call.1} parent=1 // pred_region
      %s59 = ssub.s32 6144, 6144
      %60 = vsyncadd [#allocation10], %s59
      %s61 = sshll.u32 [#allocation9], 4
      %s62 = int_to_ptr.vmem [resolvable:$true] %s61
      %67 = dma.hbm_to_vmem [thread:$0]  %s3, 6144, %s62, [#allocation10], 384, 384, 24
    $region17: #{tpu_custom_call.1} parent=1 // pred_fallthru
      _
    // Predicated region
    $region18: #{tpu_custom_call.1} parent=1 // pred_check
      _
    $region19: #{tpu_custom_call.1} parent=1 // pred_check_branch
      %69 = sbr.rel (0) target = $region21
    $region20: #{tpu_custom_call.1} parent=1 // pred_region
      %s71 = ssub.s32 6144, 6144
      %72 = vsyncadd [#allocation10], %s71
      %s73 = sshll.u32 [#allocation11], 4
      %s74 = int_to_ptr.vmem [resolvable:$true] %s73
      %79 = dma.hbm_to_vmem [thread:$0]  %s4, 6144, %s74, [#allocation10], 384, 384, 24
    $region21: #{tpu_custom_call.1} parent=1 // pred_fallthru
      _
    // Predicated region
    $region22: #{tpu_custom_call.1} parent=1 // pred_check
      _
    $region23: #{tpu_custom_call.1} parent=1 // pred_check_branch
      %81 = sbr.rel (0) target = $region25
    $region24: #{tpu_custom_call.1} parent=1 // pred_region
      _
    $region25: #{tpu_custom_call.1} parent=1 // pred_fallthru
      _
    // Predicated region
    $region26: #{tpu_custom_call.1} parent=1 // pred_check
      _
    $region27: #{tpu_custom_call.1} parent=1 // pred_check_branch
      %83 = sbr.rel (0) target = $region29
    $region28: #{tpu_custom_call.1} parent=1 // pred_region
      _
    $region29: #{tpu_custom_call.1} parent=1 // pred_fallthru
      _
    // Predicated region
    $region30: #{tpu_custom_call.1} parent=1 // pred_check
      _
    $region31: #{tpu_custom_call.1} parent=1 // pred_check_branch
      %85 = sbr.rel (0) target = $region33
    $region32: #{tpu_custom_call.1} parent=1 // pred_region
      %s87 = ssub.s32 4096, 4096
      %88 = vsyncadd [#allocation13], %s87
      %s89 = sshll.u32 [#allocation12], 4
      %s90 = int_to_ptr.vmem [resolvable:$true] %s89
      %95 = dma.hbm_to_vmem [thread:$0]  %s7, 4096, %s90, [#allocation13], 128, 128, 8
    $region33: #{tpu_custom_call.1} parent=1 // pred_fallthru
      _
    // Predicated region
    $region34: #{tpu_custom_call.1} parent=1 // pred_check
      _
    $region35: #{tpu_custom_call.1} parent=1 // pred_check_branch
      %97 = sbr.rel (0) target = $region37
    $region36: #{tpu_custom_call.1} parent=1 // pred_region
      _
    $region37: #{tpu_custom_call.1} parent=1 // pred_fallthru
      _
    // Predicated region
    $region38: #{tpu_custom_call.1} parent=1 // pred_check
      _
    $region39: #{tpu_custom_call.1} parent=1 // pred_check_branch
      %99 = sbr.rel (0) target = $region41
    $region40: #{tpu_custom_call.1} parent=1 // pred_region
      %s101 = ssub.s32 2048, 2048
      %102 = vsyncadd [#allocation13], %s101
      %s103 = sshll.u32 [#allocation14], 4
      %s104 = int_to_ptr.vmem [resolvable:$true] %s103
      %109 = dma.hbm_to_vmem [thread:$0]  %s9, 2048, %s104, [#allocation13], 128, 128, 8
    $region41: #{tpu_custom_call.1} parent=1 // pred_fallthru
      _
    // Predicated region
    $region42: #{tpu_custom_call.1} parent=1 // pred_check
      _
    $region43: #{tpu_custom_call.1} parent=1 // pred_check_branch
      %111 = sbr.rel (0) target = $region45
    $region44: #{tpu_custom_call.1} parent=1 // pred_region
      _
    $region45: #{tpu_custom_call.1} parent=1 // pred_fallthru
      _
    // Predicated region
    $region46: #{tpu_custom_call.1} parent=1 // pred_check
      _
    $region47: #{tpu_custom_call.1} parent=1 // pred_check_branch
      %113 = sbr.rel (0) target = $region49
    $region48: #{tpu_custom_call.1} parent=1 // pred_region
      %114 = dma.done [#allocation4], 128
    $region49: #{tpu_custom_call.1} parent=1 // pred_fallthru
      _
    // Predicated region
    $region50: #{tpu_custom_call.1} parent=1 // pred_check
      _
    $region51: #{tpu_custom_call.1} parent=1 // pred_check_branch
      %116 = sbr.rel (0) target = $region53
    $region52: #{tpu_custom_call.1} parent=1 // pred_region
      %117 = dma.done [#allocation7], 128
    $region53: #{tpu_custom_call.1} parent=1 // pred_fallthru
      _
    // Predicated region
    $region54: #{tpu_custom_call.1} parent=1 // pred_check
      _
    $region55: #{tpu_custom_call.1} parent=1 // pred_check_branch
      %119 = sbr.rel (0) target = $region57
    $region56: #{tpu_custom_call.1} parent=1 // pred_region
      %120 = dma.done [#allocation7], 1024
    $region57: #{tpu_custom_call.1} parent=1 // pred_fallthru
      _
    // Predicated region
    $region58: #{tpu_custom_call.1} parent=1 // pred_check
      _
    $region59: #{tpu_custom_call.1} parent=1 // pred_check_branch
      %122 = sbr.rel (0) target = $region61
    $region60: #{tpu_custom_call.1} parent=1 // pred_region
      %123 = dma.done [#allocation10], 6144
    $region61: #{tpu_custom_call.1} parent=1 // pred_fallthru
      _
    // Predicated region
    $region62: #{tpu_custom_call.1} parent=1 // pred_check
      _
    $region63: #{tpu_custom_call.1} parent=1 // pred_check_branch
      %125 = sbr.rel (0) target = $region65
    $region64: #{tpu_custom_call.1} parent=1 // pred_region
      %126 = dma.done [#allocation10], 6144
    $region65: #{tpu_custom_call.1} parent=1 // pred_fallthru
      _
    // Predicated region
    $region66: #{tpu_custom_call.1} parent=1 // pred_check
      _
    $region67: #{tpu_custom_call.1} parent=1 // pred_check_branch
      %128 = sbr.rel (0) target = $region69
    $region68: #{tpu_custom_call.1} parent=1 // pred_region
      %129 = dma.done [#allocation13], 4096
    $region69: #{tpu_custom_call.1} parent=1 // pred_fallthru
      _
    // Predicated region
    $region70: #{tpu_custom_call.1} parent=1 // pred_check
      _
    $region71: #{tpu_custom_call.1} parent=1 // pred_check_branch
      %131 = sbr.rel (0) target = $region73
    $region72: #{tpu_custom_call.1} parent=1 // pred_region
      %132 = dma.done [#allocation13], 2048
    $region73: #{tpu_custom_call.1} parent=1 // pred_fallthru
      _
    %p133 = scmp.eq.s32.totalorder 0, 0
    // Predicated region
    $region74: #{tpu_custom_call.1} parent=1 // pred_check
      %p134 = pneg %p133
    $region75: #{tpu_custom_call.1} parent=1 // pred_check_branch
      %136 = sbr.rel (%p134) target = $region77
    $region76: #{tpu_custom_call.1} parent=1 // pred_region
      %v137 = vld [vmem:[#allocation3] sm:$0xff]
      %v138 = vld [vmem:[#allocation6] sm:$0xff]
      %v139 = vld [vmem:[#allocation9] sm:$0xff]
      %v140 = vld [vmem:[#allocation9 + $0x8] sm:$0xff]
      %v141 = vld [vmem:[#allocation9 + $0x10] sm:$0xff]
      %v142 = vld [vmem:[#allocation9 + $0x18] sm:$0xff]
      %v143 = vld [vmem:[#allocation9 + $0x20] sm:$0xff]
      %v144 = vld [vmem:[#allocation9 + $0x28] sm:$0xff]
      %v145 = vld [vmem:[#allocation9 + $0x30] sm:$0xff]
      %v146 = vld [vmem:[#allocation9 + $0x38] sm:$0xff]
      %v147 = vld [vmem:[#allocation9 + $0x40] sm:$0xff]
      %v148 = vld [vmem:[#allocation9 + $0x48] sm:$0xff]
      %v149 = vld [vmem:[#allocation9 + $0x50] sm:$0xff]
      %v150 = vld [vmem:[#allocation9 + $0x58] sm:$0xff]
      %v151 = vld [vmem:[#allocation9 + $0x60] sm:$0xff]
      %v152 = vld [vmem:[#allocation9 + $0x68] sm:$0xff]
      %v153 = vld [vmem:[#allocation9 + $0x70] sm:$0xff]
      %v154 = vld [vmem:[#allocation9 + $0x78] sm:$0xff]
      %v155 = vld [vmem:[#allocation9 + $0x80] sm:$0xff]
      %v156 = vld [vmem:[#allocation9 + $0x88] sm:$0xff]
      %v157 = vld [vmem:[#allocation9 + $0x90] sm:$0xff]
      %v158 = vld [vmem:[#allocation9 + $0x98] sm:$0xff]
      %v159 = vld [vmem:[#allocation9 + $0xa0] sm:$0xff]
      %v160 = vld [vmem:[#allocation9 + $0xa8] sm:$0xff]
      %v161 = vld [vmem:[#allocation9 + $0xb0] sm:$0xff]
      %v162 = vld [vmem:[#allocation9 + $0xb8] sm:$0xff]
      %v163 = vld [vmem:[#allocation9 + $0xc0] sm:$0xff]
      %v164 = vld [vmem:[#allocation9 + $0xc8] sm:$0xff]
      %v165 = vld [vmem:[#allocation9 + $0xd0] sm:$0xff]
      %v166 = vld [vmem:[#allocation9 + $0xd8] sm:$0xff]
      %v167 = vld [vmem:[#allocation9 + $0xe0] sm:$0xff]
      %v168 = vld [vmem:[#allocation9 + $0xe8] sm:$0xff]
      %v169 = vld [vmem:[#allocation9 + $0xf0] sm:$0xff]
      %v170 = vld [vmem:[#allocation9 + $0xf8] sm:$0xff]
      %v171 = vld [vmem:[#allocation9 + $0x100] sm:$0xff]
      %v172 = vld [vmem:[#allocation9 + $0x108] sm:$0xff]
      %v173 = vld [vmem:[#allocation9 + $0x110] sm:$0xff]
      %v174 = vld [vmem:[#allocation9 + $0x118] sm:$0xff]
      %v175 = vld [vmem:[#allocation9 + $0x120] sm:$0xff]
      %v176 = vld [vmem:[#allocation9 + $0x128] sm:$0xff]
      %v177 = vld [vmem:[#allocation9 + $0x130] sm:$0xff]
      %v178 = vld [vmem:[#allocation9 + $0x138] sm:$0xff]
      %v179 = vld [vmem:[#allocation9 + $0x140] sm:$0xff]
      %v180 = vld [vmem:[#allocation9 + $0x148] sm:$0xff]
      %v181 = vld [vmem:[#allocation9 + $0x150] sm:$0xff]
      %v182 = vld [vmem:[#allocation9 + $0x158] sm:$0xff]
      %v183 = vld [vmem:[#allocation9 + $0x160] sm:$0xff]
      %v184 = vld [vmem:[#allocation9 + $0x168] sm:$0xff]
      %v185 = vld [vmem:[#allocation9 + $0x170] sm:$0xff]
      %v186 = vld [vmem:[#allocation9 + $0x178] sm:$0xff]
      %v187 = vld [vmem:[%s5] sm:$0x7]
      %v189 = vlaneseq
      %v190 = vshrl.u32 %v189, 7
      %v191 = vsub.s32 0, %v190
      %v192 = vrot.slane %v187, %v191
      %v193 = vlaneseq
      %v194 = vshrl.u32 %v193, 7
      %v195 = vsub.s32 1, %v194
      %v196 = vrot.slane %v187, %v195
      %v197 = vlaneseq
      %v198 = vshrl.u32 %v197, 7
      %v199 = vsub.s32 2, %v198
      %v200 = vrot.slane %v187, %v199
      %204 = vmatprep.subr.mxu0 %v140
      %205 = vmatpush1.msra.mxu0 %v139
      %206 = vmatprep.subr.mxu0 %v143
      %207 = vmatpush1.msra.mxu0 %v142
      %208 = vmatprep.subr.mxu0 %v146
      %209 = vmatpush1.msra.mxu0 %v145
      %210 = vmatprep.subr.mxu0 %v149
      %211 = vmatpush1.msra.mxu0 %v148
      %212 = vmatprep.subr.mxu0 %v152
      %213 = vmatpush1.msra.mxu0 %v151
      %214 = vmatprep.subr.mxu0 %v155
      %215 = vmatpush1.msra.mxu0 %v154
      %216 = vmatprep.subr.mxu0 %v158
      %217 = vmatpush1.msra.mxu0 %v157
      %218 = vmatprep.subr.mxu0 %v161
      %219 = vmatpush1.msra.mxu0 %v160
      %220 = vmatprep.subr.mxu0 %v164
      %221 = vmatpush1.msra.mxu0 %v163
      %222 = vmatprep.subr.mxu0 %v167
      %223 = vmatpush1.msra.mxu0 %v166
      %224 = vmatprep.subr.mxu0 %v170
      %225 = vmatpush1.msra.mxu0 %v169
      %226 = vmatprep.subr.mxu0 %v173
      %227 = vmatpush1.msra.mxu0 %v172
      %228 = vmatprep.subr.mxu0 %v176
      %229 = vmatpush1.msra.mxu0 %v175
      %230 = vmatprep.subr.mxu0 %v179
      %231 = vmatpush1.msra.mxu0 %v178
      %232 = vmatprep.subr.mxu0 %v182
      %233 = vmatpush1.msra.mxu0 %v181
      %234 = vmatprep.subr.mxu0 %v185
      %235 = vmatpush1.msra.mxu0 %v184
      %236 = vmatprep.subr.mxu0 0.0
      %237 = vmatpush1.msra.mxu0 0.0
      %238 = vmatprep.subr.mxu0 0.0
      %239 = vmatpush1.msra.mxu0 0.0
      %240 = vmatprep.subr.mxu0 0.0
      %241 = vmatpush1.msra.mxu0 0.0
      %242 = vmatprep.subr.mxu0 0.0
      %243 = vmatpush1.msra.mxu0 0.0
      %244 = vmatprep.subr.mxu0 0.0
      %245 = vmatpush1.msra.mxu0 0.0
      %246 = vmatprep.subr.mxu0 0.0
      %247 = vmatpush1.msra.mxu0 0.0
      %248 = vmatprep.subr.mxu0 0.0
      %249 = vmatpush1.msra.mxu0 0.0
      %250 = vmatprep.subr.mxu0 0.0
      %251 = vmatpush1.msra.mxu0 0.0
      %252 = vmatprep.subr.mxu0 0.0
      %253 = vmatpush1.msra.mxu0 0.0
      %254 = vmatprep.subr.mxu0 0.0
      %255 = vmatpush1.msra.mxu0 0.0
      %256 = vmatprep.subr.mxu0 0.0
      %257 = vmatpush1.msra.mxu0 0.0
      %258 = vmatprep.subr.mxu0 0.0
      %259 = vmatpush1.msra.mxu0 0.0
      %260 = vmatprep.subr.mxu0 0.0
      %261 = vmatpush1.msra.mxu0 0.0
      %262 = vmatprep.subr.mxu0 0.0
      %263 = vmatpush1.msra.mxu0 0.0
      %264 = vmatprep.subr.mxu0 0.0
      %265 = vmatpush1.msra.mxu0 0.0
      %266 = vmatprep.subr.mxu0 0.0
      %267 = vmatpush1.msra.mxu0 0.0
      %268 = vmatprep.mubr.f32.mxu0 0.0
      %269 = vmatmul.mubr.f32.gmra.mrb[0].mxu0 %v137
      %v270 = vpop.f32.mrb[0].mxu0
      %v271 = vadd.f32 %v192, %v270
      %v272 = vpop.f32.mrb[0].mxu0
      %v273 = vadd.f32 %v196, %v272
      %274 = vdwg.mxu0
      %275 = vmatprep.subr.mxu0 0.0
      %276 = vmatpush1.msra.mxu0 %v141
      %277 = vmatprep.subr.mxu0 0.0
      %278 = vmatpush1.msra.mxu0 %v144
      %279 = vmatprep.subr.mxu0 0.0
      %280 = vmatpush1.msra.mxu0 %v147
      %281 = vmatprep.subr.mxu0 0.0
      %282 = vmatpush1.msra.mxu0 %v150
      %283 = vmatprep.subr.mxu0 0.0
      %284 = vmatpush1.msra.mxu0 %v153
      %285 = vmatprep.subr.mxu0 0.0
      %286 = vmatpush1.msra.mxu0 %v156
      %287 = vmatprep.subr.mxu0 0.0
      %288 = vmatpush1.msra.mxu0 %v159
      %289 = vmatprep.subr.mxu0 0.0
      %290 = vmatpush1.msra.mxu0 %v162
      %291 = vmatprep.subr.mxu0 0.0
      %292 = vmatpush1.msra.mxu0 %v165
      %293 = vmatprep.subr.mxu0 0.0
      %294 = vmatpush1.msra.mxu0 %v168
      %295 = vmatprep.subr.mxu0 0.0
      %296 = vmatpush1.msra.mxu0 %v171
      %297 = vmatprep.subr.mxu0 0.0
      %298 = vmatpush1.msra.mxu0 %v174
      %299 = vmatprep.subr.mxu0 0.0
      %300 = vmatpush1.msra.mxu0 %v177
      %301 = vmatprep.subr.mxu0 0.0
      %302 = vmatpush1.msra.mxu0 %v180
      %303 = vmatprep.subr.mxu0 0.0
      %304 = vmatpush1.msra.mxu0 %v183
      %305 = vmatprep.subr.mxu0 0.0
      %306 = vmatpush1.msra.mxu0 %v186
      %307 = vmatprep.subr.mxu0 0.0
      %308 = vmatpush1.msra.mxu0 0.0
      %309 = vmatprep.subr.mxu0 0.0
      %310 = vmatpush1.msra.mxu0 0.0
      %311 = vmatprep.subr.mxu0 0.0
      %312 = vmatpush1.msra.mxu0 0.0
      %313 = vmatprep.subr.mxu0 0.0
      %314 = vmatpush1.msra.mxu0 0.0
      %315 = vmatprep.subr.mxu0 0.0
      %316 = vmatpush1.msra.mxu0 0.0
      %317 = vmatprep.subr.mxu0 0.0
      %318 = vmatpush1.msra.mxu0 0.0
      %319 = vmatprep.subr.mxu0 0.0
      %320 = vmatpush1.msra.mxu0 0.0
      %321 = vmatprep.subr.mxu0 0.0
      %322 = vmatpush1.msra.mxu0 0.0
      %323 = vmatprep.subr.mxu0 0.0
      %324 = vmatpush1.msra.mxu0 0.0
      %325 = vmatprep.subr.mxu0 0.0
      %326 = vmatpush1.msra.mxu0 0.0
      %327 = vmatprep.subr.mxu0 0.0
      %328 = vmatpush1.msra.mxu0 0.0
      %329 = vmatprep.subr.mxu0 0.0
      %330 = vmatpush1.msra.mxu0 0.0
      %331 = vmatprep.subr.mxu0 0.0
      %332 = vmatpush1.msra.mxu0 0.0
      %333 = vmatprep.subr.mxu0 0.0
      %334 = vmatpush1.msra.mxu0 0.0
      %335 = vmatprep.subr.mxu0 0.0
      %336 = vmatpush1.msra.mxu0 0.0
      %337 = vmatprep.subr.mxu0 0.0
      %338 = vmatpush1.msra.mxu0 0.0
      %339 = vmatprep.mubr.f32.mxu0 0.0
      %340 = vmatmul.mubr.f32.gmra.mrb[0].mxu0 %v137
      %v341 = vpop.f32.mrb[0].mxu0
      %v342 = vadd.f32 %v200, %v341
      %v343 = vpop.f32.mrb[0].mxu0
      %344 = vdwg.mxu0
      %v345 = vld [vmem:[#allocation11] sm:$0xff]
      %v346 = vld [vmem:[#allocation11 + $0x8] sm:$0xff]
      %v347 = vld [vmem:[#allocation11 + $0x10] sm:$0xff]
      %v348 = vld [vmem:[#allocation11 + $0x18] sm:$0xff]
      %v349 = vld [vmem:[#allocation11 + $0x20] sm:$0xff]
      %v350 = vld [vmem:[#allocation11 + $0x28] sm:$0xff]
      %v351 = vld [vmem:[#allocation11 + $0x30] sm:$0xff]
      %v352 = vld [vmem:[#allocation11 + $0x38] sm:$0xff]
      %v353 = vld [vmem:[#allocation11 + $0x40] sm:$0xff]
      %v354 = vld [vmem:[#allocation11 + $0x48] sm:$0xff]
      %v355 = vld [vmem:[#allocation11 + $0x50] sm:$0xff]
      %v356 = vld [vmem:[#allocation11 + $0x58] sm:$0xff]
      %v357 = vld [vmem:[#allocation11 + $0x60] sm:$0xff]
      %v358 = vld [vmem:[#allocation11 + $0x68] sm:$0xff]
      %v359 = vld [vmem:[#allocation11 + $0x70] sm:$0xff]
      %v360 = vld [vmem:[#allocation11 + $0x78] sm:$0xff]
      %v361 = vld [vmem:[#allocation11 + $0x80] sm:$0xff]
      %v362 = vld [vmem:[#allocation11 + $0x88] sm:$0xff]
      %v363 = vld [vmem:[#allocation11 + $0x90] sm:$0xff]
      %v364 = vld [vmem:[#allocation11 + $0x98] sm:$0xff]
      %v365 = vld [vmem:[#allocation11 + $0xa0] sm:$0xff]
      %v366 = vld [vmem:[#allocation11 + $0xa8] sm:$0xff]
      %v367 = vld [vmem:[#allocation11 + $0xb0] sm:$0xff]
      %v368 = vld [vmem:[#allocation11 + $0xb8] sm:$0xff]
      %v369 = vld [vmem:[#allocation11 + $0xc0] sm:$0xff]
      %v370 = vld [vmem:[#allocation11 + $0xc8] sm:$0xff]
      %v371 = vld [vmem:[#allocation11 + $0xd0] sm:$0xff]
      %v372 = vld [vmem:[#allocation11 + $0xd8] sm:$0xff]
      %v373 = vld [vmem:[#allocation11 + $0xe0] sm:$0xff]
      %v374 = vld [vmem:[#allocation11 + $0xe8] sm:$0xff]
      %v375 = vld [vmem:[#allocation11 + $0xf0] sm:$0xff]
      %v376 = vld [vmem:[#allocation11 + $0xf8] sm:$0xff]
      %v377 = vld [vmem:[#allocation11 + $0x100] sm:$0xff]
      %v378 = vld [vmem:[#allocation11 + $0x108] sm:$0xff]
      %v379 = vld [vmem:[#allocation11 + $0x110] sm:$0xff]
      %v380 = vld [vmem:[#allocation11 + $0x118] sm:$0xff]
      %v381 = vld [vmem:[#allocation11 + $0x120] sm:$0xff]
      %v382 = vld [vmem:[#allocation11 + $0x128] sm:$0xff]
      %v383 = vld [vmem:[#allocation11 + $0x130] sm:$0xff]
      %v384 = vld [vmem:[#allocation11 + $0x138] sm:$0xff]
      %v385 = vld [vmem:[#allocation11 + $0x140] sm:$0xff]
      %v386 = vld [vmem:[#allocation11 + $0x148] sm:$0xff]
      %v387 = vld [vmem:[#allocation11 + $0x150] sm:$0xff]
      %v388 = vld [vmem:[#allocation11 + $0x158] sm:$0xff]
      %v389 = vld [vmem:[#allocation11 + $0x160] sm:$0xff]
      %v390 = vld [vmem:[#allocation11 + $0x168] sm:$0xff]
      %v391 = vld [vmem:[#allocation11 + $0x170] sm:$0xff]
      %v392 = vld [vmem:[#allocation11 + $0x178] sm:$0xff]
      %393 = vmatprep.subr.mxu0 %v346
      %394 = vmatpush1.msra.mxu0 %v345
      %395 = vmatprep.subr.mxu0 %v349
      %396 = vmatpush1.msra.mxu0 %v348
      %397 = vmatprep.subr.mxu0 %v352
      %398 = vmatpush1.msra.mxu0 %v351
      %399 = vmatprep.subr.mxu0 %v355
      %400 = vmatpush1.msra.mxu0 %v354
      %401 = vmatprep.subr.mxu0 %v358
      %402 = vmatpush1.msra.mxu0 %v357
      %403 = vmatprep.subr.mxu0 %v361
      %404 = vmatpush1.msra.mxu0 %v360
      %405 = vmatprep.subr.mxu0 %v364
      %406 = vmatpush1.msra.mxu0 %v363
      %407 = vmatprep.subr.mxu0 %v367
      %408 = vmatpush1.msra.mxu0 %v366
      %409 = vmatprep.subr.mxu0 %v370
      %410 = vmatpush1.msra.mxu0 %v369
      %411 = vmatprep.subr.mxu0 %v373
      %412 = vmatpush1.msra.mxu0 %v372
      %413 = vmatprep.subr.mxu0 %v376
      %414 = vmatpush1.msra.mxu0 %v375
      %415 = vmatprep.subr.mxu0 %v379
      %416 = vmatpush1.msra.mxu0 %v378
      %417 = vmatprep.subr.mxu0 %v382
      %418 = vmatpush1.msra.mxu0 %v381
      %419 = vmatprep.subr.mxu0 %v385
      %420 = vmatpush1.msra.mxu0 %v384
      %421 = vmatprep.subr.mxu0 %v388
      %422 = vmatpush1.msra.mxu0 %v387
      %423 = vmatprep.subr.mxu0 %v391
      %424 = vmatpush1.msra.mxu0 %v390
      %425 = vmatprep.subr.mxu0 0.0
      %426 = vmatpush1.msra.mxu0 0.0
      %427 = vmatprep.subr.mxu0 0.0
      %428 = vmatpush1.msra.mxu0 0.0
      %429 = vmatprep.subr.mxu0 0.0
      %430 = vmatpush1.msra.mxu0 0.0
      %431 = vmatprep.subr.mxu0 0.0
      %432 = vmatpush1.msra.mxu0 0.0
      %433 = vmatprep.subr.mxu0 0.0
      %434 = vmatpush1.msra.mxu0 0.0
      %435 = vmatprep.subr.mxu0 0.0
      %436 = vmatpush1.msra.mxu0 0.0
      %437 = vmatprep.subr.mxu0 0.0
      %438 = vmatpush1.msra.mxu0 0.0
      %439 = vmatprep.subr.mxu0 0.0
      %440 = vmatpush1.msra.mxu0 0.0
      %441 = vmatprep.subr.mxu0 0.0
      %442 = vmatpush1.msra.mxu0 0.0
      %443 = vmatprep.subr.mxu0 0.0
      %444 = vmatpush1.msra.mxu0 0.0
      %445 = vmatprep.subr.mxu0 0.0
      %446 = vmatpush1.msra.mxu0 0.0
      %447 = vmatprep.subr.mxu0 0.0
      %448 = vmatpush1.msra.mxu0 0.0
      %449 = vmatprep.subr.mxu0 0.0
      %450 = vmatpush1.msra.mxu0 0.0
      %451 = vmatprep.subr.mxu0 0.0
      %452 = vmatpush1.msra.mxu0 0.0
      %453 = vmatprep.subr.mxu0 0.0
      %454 = vmatpush1.msra.mxu0 0.0
      %455 = vmatprep.subr.mxu0 0.0
      %456 = vmatpush1.msra.mxu0 0.0
      %457 = vmatprep.mubr.f32.mxu0 0.0
      %458 = vmatmul.mubr.f32.gmra.mrb[0].mxu0 %v138
      %v459 = vpop.f32.mrb[0].mxu0
      %v460 = vadd.f32 0.0, %v459
      %v461 = vpop.f32.mrb[0].mxu0
      %v462 = vadd.f32 0.0, %v461
      %463 = vdwg.mxu0
      %464 = vmatprep.subr.mxu0 0.0
      %465 = vmatpush1.msra.mxu0 %v347
      %466 = vmatprep.subr.mxu0 0.0
      %467 = vmatpush1.msra.mxu0 %v350
      %468 = vmatprep.subr.mxu0 0.0
      %469 = vmatpush1.msra.mxu0 %v353
      %470 = vmatprep.subr.mxu0 0.0
      %471 = vmatpush1.msra.mxu0 %v356
      %472 = vmatprep.subr.mxu0 0.0
      %473 = vmatpush1.msra.mxu0 %v359
      %474 = vmatprep.subr.mxu0 0.0
      %475 = vmatpush1.msra.mxu0 %v362
      %476 = vmatprep.subr.mxu0 0.0
      %477 = vmatpush1.msra.mxu0 %v365
      %478 = vmatprep.subr.mxu0 0.0
      %479 = vmatpush1.msra.mxu0 %v368
      %480 = vmatprep.subr.mxu0 0.0
      %481 = vmatpush1.msra.mxu0 %v371
      %482 = vmatprep.subr.mxu0 0.0
      %483 = vmatpush1.msra.mxu0 %v374
      %484 = vmatprep.subr.mxu0 0.0
      %485 = vmatpush1.msra.mxu0 %v377
      %486 = vmatprep.subr.mxu0 0.0
      %487 = vmatpush1.msra.mxu0 %v380
      %488 = vmatprep.subr.mxu0 0.0
      %489 = vmatpush1.msra.mxu0 %v383
      %490 = vmatprep.subr.mxu0 0.0
      %491 = vmatpush1.msra.mxu0 %v386
      %492 = vmatprep.subr.mxu0 0.0
      %493 = vmatpush1.msra.mxu0 %v389
      %494 = vmatprep.subr.mxu0 0.0
      %495 = vmatpush1.msra.mxu0 %v392
      %496 = vmatprep.subr.mxu0 0.0
      %497 = vmatpush1.msra.mxu0 0.0
      %498 = vmatprep.subr.mxu0 0.0
      %499 = vmatpush1.msra.mxu0 0.0
      %500 = vmatprep.subr.mxu0 0.0
      %501 = vmatpush1.msra.mxu0 0.0
      %502 = vmatprep.subr.mxu0 0.0
      %503 = vmatpush1.msra.mxu0 0.0
      %504 = vmatprep.subr.mxu0 0.0
      %505 = vmatpush1.msra.mxu0 0.0
      %506 = vmatprep.subr.mxu0 0.0
      %507 = vmatpush1.msra.mxu0 0.0
      %508 = vmatprep.subr.mxu0 0.0
      %509 = vmatpush1.msra.mxu0 0.0
      %510 = vmatprep.subr.mxu0 0.0
      %511 = vmatpush1.msra.mxu0 0.0
      %512 = vmatprep.subr.mxu0 0.0
      %513 = vmatpush1.msra.mxu0 0.0
      %514 = vmatprep.subr.mxu0 0.0
      %515 = vmatpush1.msra.mxu0 0.0
      %516 = vmatprep.subr.mxu0 0.0
      %517 = vmatpush1.msra.mxu0 0.0
      %518 = vmatprep.subr.mxu0 0.0
      %519 = vmatpush1.msra.mxu0 0.0
      %520 = vmatprep.subr.mxu0 0.0
      %521 = vmatpush1.msra.mxu0 0.0
      %522 = vmatprep.subr.mxu0 0.0
      %523 = vmatpush1.msra.mxu0 0.0
      %524 = vmatprep.subr.mxu0 0.0
      %525 = vmatpush1.msra.mxu0 0.0
      %526 = vmatprep.subr.mxu0 0.0
      %527 = vmatpush1.msra.mxu0 0.0
      %528 = vmatprep.mubr.f32.mxu0 0.0
      %529 = vmatmul.mubr.f32.gmra.mrb[0].mxu0 %v138
      %v530 = vpop.f32.mrb[0].mxu0
      %v531 = vadd.f32 0.0, %v530
      %v532 = vpop.f32.mrb[0].mxu0
      %533 = vdwg.mxu0
      %v534 = vadd.f32 %v271, %v460
      %v535 = vxor.u32 %v534, 2147483648
      %v536 = vmul.f32 %v535, 1.442695
      %v537 = vpow.pop %v536
      %v538 = vadd.f32 %v537, 1.0
      %v539 = vrcp.pop %v538
      %v540 = vmul.f32 1.0, %v539
      %v541 = vadd.f32 %v273, %v462
      %v542 = vxor.u32 %v541, 2147483648
      %v543 = vmul.f32 %v542, 1.442695
      %v544 = vpow.pop %v543
      %v545 = vadd.f32 %v544, 1.0
      %v546 = vrcp.pop %v545
      %v547 = vmul.f32 1.0, %v546
      %v548 = vld [vmem:[%s6] sm:$0x1]
      %v550 = vlaneseq
      %v551 = vshrl.u32 %v550, 7
      %v552 = vsub.s32 0, %v551
      %v553 = vrot.slane %v548, %v552
      %v555 = vadd.f32 %v531, %v553
      %v556 = vmul.f32 %v540, %v555
      %v557 = vadd.f32 %v342, %v556
      %v558 = vtanh.pop %v557
      %v559 = vsub.f32 1.0, %v547
      %v560 = vmul.f32 %v559, %v558
      %v561 = vmul.f32 %v547, %v138
      %v562 = vadd.f32 %v560, %v561
      %563 = vst [vmem:[#allocation16] sm:$0xff] %v562
      %v564 = vld [vmem:[#allocation8] sm:$0xff]
      %v565 = vld [vmem:[#allocation8 + $0x8] sm:$0xff]
      %v566 = vld [vmem:[#allocation8 + $0x10] sm:$0xff]
      %v567 = vld [vmem:[#allocation8 + $0x18] sm:$0xff]
      %v568 = vld [vmem:[#allocation8 + $0x20] sm:$0xff]
      %v569 = vld [vmem:[#allocation8 + $0x28] sm:$0xff]
      %v570 = vld [vmem:[#allocation8 + $0x30] sm:$0xff]
      %v571 = vld [vmem:[#allocation8 + $0x38] sm:$0xff]
      %v573 = vcombine.high %v562, %v562
      %v575 = vunpack.c.l.s4 1966171168
      %v576 = vunpack.c.0.s8 %v575
      %v577 = vlaneseq
      %v578 = vshrl.u32 %v577, 7
      %v579 = vsub.s32 %v576, %v578
      %v580 = vrot.slane %v562, %v579
      %v582 = vunpack.c.l.s4 1966171168
      %v583 = vunpack.c.0.s8 %v582
      %v584 = vlaneseq
      %v585 = vshrl.u32 %v584, 7
      %v586 = vsub.s32 %v583, %v585
      %v587 = vrot.slane %v573, %v586
      %v588 = vcombine.high %v580, %v580
      %v589 = vcombine.high %v587, %v587
      %v591 = vunpack.c.l.s4 1966171168
      %v592 = vunpack.c.0.s8 %v591
      %v593 = vlaneseq
      %v594 = vshrl.u32 %v593, 7
      %v595 = vsub.s32 %v592, %v594
      %v596 = vrot.slane %v580, %v595
      %v598 = vunpack.c.l.s4 1966171168
      %v599 = vunpack.c.0.s8 %v598
      %v600 = vlaneseq
      %v601 = vshrl.u32 %v600, 7
      %v602 = vsub.s32 %v599, %v601
      %v603 = vrot.slane %v587, %v602
      %v605 = vunpack.c.l.s4 1966171168
      %v606 = vunpack.c.0.s8 %v605
      %v607 = vlaneseq
      %v608 = vshrl.u32 %v607, 7
      %v609 = vsub.s32 %v606, %v608
      %v610 = vrot.slane %v588, %v609
      %v612 = vunpack.c.l.s4 1966171168
      %v613 = vunpack.c.0.s8 %v612
      %v614 = vlaneseq
      %v615 = vshrl.u32 %v614, 7
      %v616 = vsub.s32 %v613, %v615
      %v617 = vrot.slane %v589, %v616
      %v618 = vcombine.high %v596, %v596
      %v619 = vcombine.high %v603, %v603
      %v620 = vcombine.high %v610, %v610
      %v621 = vcombine.high %v617, %v617
      %630 = vmatprep.subr.mxu0 0.0
      %631 = vmatpush1.xpose.msra.mxu0 %v564
      %632 = vmatprep.subr.mxu0 0.0
      %633 = vmatpush1.xpose.msra.mxu0 0.0
      %634 = vmatprep.subr.mxu0 0.0
      %635 = vmatpush1.xpose.msra.mxu0 0.0
      %636 = vmatprep.subr.mxu0 0.0
      %637 = vmatpush1.xpose.msra.mxu0 0.0
      %638 = vmatprep.subr.mxu0 0.0
      %639 = vmatpush1.xpose.msra.mxu0 0.0
      %640 = vmatprep.subr.mxu0 0.0
      %641 = vmatpush1.xpose.msra.mxu0 0.0
      %642 = vmatprep.subr.mxu0 0.0
      %643 = vmatpush1.xpose.msra.mxu0 0.0
      %644 = vmatprep.subr.mxu0 0.0
      %645 = vmatpush1.xpose.msra.mxu0 0.0
      %646 = vmatprep.subr.mxu0 0.0
      %647 = vmatpush1.xpose.msra.mxu0 0.0
      %648 = vmatprep.subr.mxu0 0.0
      %649 = vmatpush1.xpose.msra.mxu0 0.0
      %650 = vmatprep.subr.mxu0 0.0
      %651 = vmatpush1.xpose.msra.mxu0 0.0
      %652 = vmatprep.subr.mxu0 0.0
      %653 = vmatpush1.xpose.msra.mxu0 0.0
      %654 = vmatprep.subr.mxu0 0.0
      %655 = vmatpush1.xpose.msra.mxu0 0.0
      %656 = vmatprep.subr.mxu0 0.0
      %657 = vmatpush1.xpose.msra.mxu0 0.0
      %658 = vmatprep.subr.mxu0 0.0
      %659 = vmatpush1.xpose.msra.mxu0 0.0
      %660 = vmatprep.subr.mxu0 0.0
      %661 = vmatpush1.xpose.msra.mxu0 0.0
      %662 = vmatprep.subr.mxu0 0.0
      %663 = vmatpush1.xpose.msra.mxu0 0.0
      %664 = vmatprep.subr.mxu0 0.0
      %665 = vmatpush1.xpose.msra.mxu0 0.0
      %666 = vmatprep.subr.mxu0 0.0
      %667 = vmatpush1.xpose.msra.mxu0 0.0
      %668 = vmatprep.subr.mxu0 0.0
      %669 = vmatpush1.xpose.msra.mxu0 0.0
      %670 = vmatprep.subr.mxu0 0.0
      %671 = vmatpush1.xpose.msra.mxu0 0.0
      %672 = vmatprep.subr.mxu0 0.0
      %673 = vmatpush1.xpose.msra.mxu0 0.0
      %674 = vmatprep.subr.mxu0 0.0
      %675 = vmatpush1.xpose.msra.mxu0 0.0
      %676 = vmatprep.subr.mxu0 0.0
      %677 = vmatpush1.xpose.msra.mxu0 0.0
      %678 = vmatprep.subr.mxu0 0.0
      %679 = vmatpush1.xpose.msra.mxu0 0.0
      %680 = vmatprep.subr.mxu0 0.0
      %681 = vmatpush1.xpose.msra.mxu0 0.0
      %682 = vmatprep.subr.mxu0 0.0
      %683 = vmatpush1.xpose.msra.mxu0 0.0
      %684 = vmatprep.subr.mxu0 0.0
      %685 = vmatpush1.xpose.msra.mxu0 0.0
      %686 = vmatprep.subr.mxu0 0.0
      %687 = vmatpush1.xpose.msra.mxu0 0.0
      %688 = vmatprep.subr.mxu0 0.0
      %689 = vmatpush1.xpose.msra.mxu0 0.0
      %690 = vmatprep.subr.mxu0 0.0
      %691 = vmatpush1.xpose.msra.mxu0 0.0
      %692 = vmatprep.subr.mxu0 0.0
      %693 = vmatpush1.xpose.msra.mxu0 0.0
      %694 = vmatprep.mubr.f32.mxu0 0.0
      %695 = vmatmul.mubr.f32.gmra.mrb[0].mxu0 %v596
      %v696 = vpop.f32.mrb[0].mxu0
      %v697 = vadd.f32 0.0, %v696
      %v698 = vpop.f32.mrb[0].mxu0
      %699 = vdwg.mxu0
      %700 = vmatprep.subr.mxu0 0.0
      %701 = vmatpush1.xpose.msra.mxu0 %v565
      %702 = vmatprep.subr.mxu0 0.0
      %703 = vmatpush1.xpose.msra.mxu0 0.0
      %704 = vmatprep.subr.mxu0 0.0
      %705 = vmatpush1.xpose.msra.mxu0 0.0
      %706 = vmatprep.subr.mxu0 0.0
      %707 = vmatpush1.xpose.msra.mxu0 0.0
      %708 = vmatprep.subr.mxu0 0.0
      %709 = vmatpush1.xpose.msra.mxu0 0.0
      %710 = vmatprep.subr.mxu0 0.0
      %711 = vmatpush1.xpose.msra.mxu0 0.0
      %712 = vmatprep.subr.mxu0 0.0
      %713 = vmatpush1.xpose.msra.mxu0 0.0
      %714 = vmatprep.subr.mxu0 0.0
      %715 = vmatpush1.xpose.msra.mxu0 0.0
      %716 = vmatprep.subr.mxu0 0.0
      %717 = vmatpush1.xpose.msra.mxu0 0.0
      %718 = vmatprep.subr.mxu0 0.0
      %719 = vmatpush1.xpose.msra.mxu0 0.0
      %720 = vmatprep.subr.mxu0 0.0
      %721 = vmatpush1.xpose.msra.mxu0 0.0
      %722 = vmatprep.subr.mxu0 0.0
      %723 = vmatpush1.xpose.msra.mxu0 0.0
      %724 = vmatprep.subr.mxu0 0.0
      %725 = vmatpush1.xpose.msra.mxu0 0.0
      %726 = vmatprep.subr.mxu0 0.0
      %727 = vmatpush1.xpose.msra.mxu0 0.0
      %728 = vmatprep.subr.mxu0 0.0
      %729 = vmatpush1.xpose.msra.mxu0 0.0
      %730 = vmatprep.subr.mxu0 0.0
      %731 = vmatpush1.xpose.msra.mxu0 0.0
      %732 = vmatprep.subr.mxu0 0.0
      %733 = vmatpush1.xpose.msra.mxu0 0.0
      %734 = vmatprep.subr.mxu0 0.0
      %735 = vmatpush1.xpose.msra.mxu0 0.0
      %736 = vmatprep.subr.mxu0 0.0
      %737 = vmatpush1.xpose.msra.mxu0 0.0
      %738 = vmatprep.subr.mxu0 0.0
      %739 = vmatpush1.xpose.msra.mxu0 0.0
      %740 = vmatprep.subr.mxu0 0.0
      %741 = vmatpush1.xpose.msra.mxu0 0.0
      %742 = vmatprep.subr.mxu0 0.0
      %743 = vmatpush1.xpose.msra.mxu0 0.0
      %744 = vmatprep.subr.mxu0 0.0
      %745 = vmatpush1.xpose.msra.mxu0 0.0
      %746 = vmatprep.subr.mxu0 0.0
      %747 = vmatpush1.xpose.msra.mxu0 0.0
      %748 = vmatprep.subr.mxu0 0.0
      %749 = vmatpush1.xpose.msra.mxu0 0.0
      %750 = vmatprep.subr.mxu0 0.0
      %751 = vmatpush1.xpose.msra.mxu0 0.0
      %752 = vmatprep.subr.mxu0 0.0
      %753 = vmatpush1.xpose.msra.mxu0 0.0
      %754 = vmatprep.subr.mxu0 0.0
      %755 = vmatpush1.xpose.msra.mxu0 0.0
      %756 = vmatprep.subr.mxu0 0.0
      %757 = vmatpush1.xpose.msra.mxu0 0.0
      %758 = vmatprep.subr.mxu0 0.0
      %759 = vmatpush1.xpose.msra.mxu0 0.0
      %760 = vmatprep.subr.mxu0 0.0
      %761 = vmatpush1.xpose.msra.mxu0 0.0
      %762 = vmatprep.subr.mxu0 0.0
      %763 = vmatpush1.xpose.msra.mxu0 0.0
      %764 = vmatprep.mubr.f32.mxu0 0.0
      %765 = vmatmul.mubr.f32.gmra.mrb[0].mxu0 %v610
      %v766 = vpop.f32.mrb[0].mxu0
      %v767 = vadd.f32 0.0, %v766
      %v768 = vpop.f32.mrb[0].mxu0
      %769 = vdwg.mxu0
      %770 = vmatprep.subr.mxu0 0.0
      %771 = vmatpush1.xpose.msra.mxu0 %v566
      %772 = vmatprep.subr.mxu0 0.0
      %773 = vmatpush1.xpose.msra.mxu0 0.0
      %774 = vmatprep.subr.mxu0 0.0
      %775 = vmatpush1.xpose.msra.mxu0 0.0
      %776 = vmatprep.subr.mxu0 0.0
      %777 = vmatpush1.xpose.msra.mxu0 0.0
      %778 = vmatprep.subr.mxu0 0.0
      %779 = vmatpush1.xpose.msra.mxu0 0.0
      %780 = vmatprep.subr.mxu0 0.0
      %781 = vmatpush1.xpose.msra.mxu0 0.0
      %782 = vmatprep.subr.mxu0 0.0
      %783 = vmatpush1.xpose.msra.mxu0 0.0
      %784 = vmatprep.subr.mxu0 0.0
      %785 = vmatpush1.xpose.msra.mxu0 0.0
      %786 = vmatprep.subr.mxu0 0.0
      %787 = vmatpush1.xpose.msra.mxu0 0.0
      %788 = vmatprep.subr.mxu0 0.0
      %789 = vmatpush1.xpose.msra.mxu0 0.0
      %790 = vmatprep.subr.mxu0 0.0
      %791 = vmatpush1.xpose.msra.mxu0 0.0
      %792 = vmatprep.subr.mxu0 0.0
      %793 = vmatpush1.xpose.msra.mxu0 0.0
      %794 = vmatprep.subr.mxu0 0.0
      %795 = vmatpush1.xpose.msra.mxu0 0.0
      %796 = vmatprep.subr.mxu0 0.0
      %797 = vmatpush1.xpose.msra.mxu0 0.0
      %798 = vmatprep.subr.mxu0 0.0
      %799 = vmatpush1.xpose.msra.mxu0 0.0
      %800 = vmatprep.subr.mxu0 0.0
      %801 = vmatpush1.xpose.msra.mxu0 0.0
      %802 = vmatprep.subr.mxu0 0.0
      %803 = vmatpush1.xpose.msra.mxu0 0.0
      %804 = vmatprep.subr.mxu0 0.0
      %805 = vmatpush1.xpose.msra.mxu0 0.0
      %806 = vmatprep.subr.mxu0 0.0
      %807 = vmatpush1.xpose.msra.mxu0 0.0
      %808 = vmatprep.subr.mxu0 0.0
      %809 = vmatpush1.xpose.msra.mxu0 0.0
      %810 = vmatprep.subr.mxu0 0.0
      %811 = vmatpush1.xpose.msra.mxu0 0.0
      %812 = vmatprep.subr.mxu0 0.0
      %813 = vmatpush1.xpose.msra.mxu0 0.0
      %814 = vmatprep.subr.mxu0 0.0
      %815 = vmatpush1.xpose.msra.mxu0 0.0
      %816 = vmatprep.subr.mxu0 0.0
      %817 = vmatpush1.xpose.msra.mxu0 0.0
      %818 = vmatprep.subr.mxu0 0.0
      %819 = vmatpush1.xpose.msra.mxu0 0.0
      %820 = vmatprep.subr.mxu0 0.0
      %821 = vmatpush1.xpose.msra.mxu0 0.0
      %822 = vmatprep.subr.mxu0 0.0
      %823 = vmatpush1.xpose.msra.mxu0 0.0
      %824 = vmatprep.subr.mxu0 0.0
      %825 = vmatpush1.xpose.msra.mxu0 0.0
      %826 = vmatprep.subr.mxu0 0.0
      %827 = vmatpush1.xpose.msra.mxu0 0.0
      %828 = vmatprep.subr.mxu0 0.0
      %829 = vmatpush1.xpose.msra.mxu0 0.0
      %830 = vmatprep.subr.mxu0 0.0
      %831 = vmatpush1.xpose.msra.mxu0 0.0
      %832 = vmatprep.subr.mxu0 0.0
      %833 = vmatpush1.xpose.msra.mxu0 0.0
      %834 = vmatprep.mubr.f32.mxu0 0.0
      %835 = vmatmul.mubr.f32.gmra.mrb[0].mxu0 %v618
      %v836 = vpop.f32.mrb[0].mxu0
      %v837 = vadd.f32 0.0, %v836
      %v838 = vpop.f32.mrb[0].mxu0
      %839 = vdwg.mxu0
      %840 = vmatprep.subr.mxu0 0.0
      %841 = vmatpush1.xpose.msra.mxu0 %v567
      %842 = vmatprep.subr.mxu0 0.0
      %843 = vmatpush1.xpose.msra.mxu0 0.0
      %844 = vmatprep.subr.mxu0 0.0
      %845 = vmatpush1.xpose.msra.mxu0 0.0
      %846 = vmatprep.subr.mxu0 0.0
      %847 = vmatpush1.xpose.msra.mxu0 0.0
      %848 = vmatprep.subr.mxu0 0.0
      %849 = vmatpush1.xpose.msra.mxu0 0.0
      %850 = vmatprep.subr.mxu0 0.0
      %851 = vmatpush1.xpose.msra.mxu0 0.0
      %852 = vmatprep.subr.mxu0 0.0
      %853 = vmatpush1.xpose.msra.mxu0 0.0
      %854 = vmatprep.subr.mxu0 0.0
      %855 = vmatpush1.xpose.msra.mxu0 0.0
      %856 = vmatprep.subr.mxu0 0.0
      %857 = vmatpush1.xpose.msra.mxu0 0.0
      %858 = vmatprep.subr.mxu0 0.0
      %859 = vmatpush1.xpose.msra.mxu0 0.0
      %860 = vmatprep.subr.mxu0 0.0
      %861 = vmatpush1.xpose.msra.mxu0 0.0
      %862 = vmatprep.subr.mxu0 0.0
      %863 = vmatpush1.xpose.msra.mxu0 0.0
      %864 = vmatprep.subr.mxu0 0.0
      %865 = vmatpush1.xpose.msra.mxu0 0.0
      %866 = vmatprep.subr.mxu0 0.0
      %867 = vmatpush1.xpose.msra.mxu0 0.0
      %868 = vmatprep.subr.mxu0 0.0
      %869 = vmatpush1.xpose.msra.mxu0 0.0
      %870 = vmatprep.subr.mxu0 0.0
      %871 = vmatpush1.xpose.msra.mxu0 0.0
      %872 = vmatprep.subr.mxu0 0.0
      %873 = vmatpush1.xpose.msra.mxu0 0.0
      %874 = vmatprep.subr.mxu0 0.0
      %875 = vmatpush1.xpose.msra.mxu0 0.0
      %876 = vmatprep.subr.mxu0 0.0
      %877 = vmatpush1.xpose.msra.mxu0 0.0
      %878 = vmatprep.subr.mxu0 0.0
      %879 = vmatpush1.xpose.msra.mxu0 0.0
      %880 = vmatprep.subr.mxu0 0.0
      %881 = vmatpush1.xpose.msra.mxu0 0.0
      %882 = vmatprep.subr.mxu0 0.0
      %883 = vmatpush1.xpose.msra.mxu0 0.0
      %884 = vmatprep.subr.mxu0 0.0
      %885 = vmatpush1.xpose.msra.mxu0 0.0
      %886 = vmatprep.subr.mxu0 0.0
      %887 = vmatpush1.xpose.msra.mxu0 0.0
      %888 = vmatprep.subr.mxu0 0.0
      %889 = vmatpush1.xpose.msra.mxu0 0.0
      %890 = vmatprep.subr.mxu0 0.0
      %891 = vmatpush1.xpose.msra.mxu0 0.0
      %892 = vmatprep.subr.mxu0 0.0
      %893 = vmatpush1.xpose.msra.mxu0 0.0
      %894 = vmatprep.subr.mxu0 0.0
      %895 = vmatpush1.xpose.msra.mxu0 0.0
      %896 = vmatprep.subr.mxu0 0.0
      %897 = vmatpush1.xpose.msra.mxu0 0.0
      %898 = vmatprep.subr.mxu0 0.0
      %899 = vmatpush1.xpose.msra.mxu0 0.0
      %900 = vmatprep.subr.mxu0 0.0
      %901 = vmatpush1.xpose.msra.mxu0 0.0
      %902 = vmatprep.subr.mxu0 0.0
      %903 = vmatpush1.xpose.msra.mxu0 0.0
      %904 = vmatprep.mubr.f32.mxu0 0.0
      %905 = vmatmul.mubr.f32.gmra.mrb[0].mxu0 %v620
      %v906 = vpop.f32.mrb[0].mxu0
      %v907 = vadd.f32 0.0, %v906
      %v908 = vpop.f32.mrb[0].mxu0
      %909 = vdwg.mxu0
      %910 = vmatprep.subr.mxu0 0.0
      %911 = vmatpush1.xpose.msra.mxu0 %v568
      %912 = vmatprep.subr.mxu0 0.0
      %913 = vmatpush1.xpose.msra.mxu0 0.0
      %914 = vmatprep.subr.mxu0 0.0
      %915 = vmatpush1.xpose.msra.mxu0 0.0
      %916 = vmatprep.subr.mxu0 0.0
      %917 = vmatpush1.xpose.msra.mxu0 0.0
      %918 = vmatprep.subr.mxu0 0.0
      %919 = vmatpush1.xpose.msra.mxu0 0.0
      %920 = vmatprep.subr.mxu0 0.0
      %921 = vmatpush1.xpose.msra.mxu0 0.0
      %922 = vmatprep.subr.mxu0 0.0
      %923 = vmatpush1.xpose.msra.mxu0 0.0
      %924 = vmatprep.subr.mxu0 0.0
      %925 = vmatpush1.xpose.msra.mxu0 0.0
      %926 = vmatprep.subr.mxu0 0.0
      %927 = vmatpush1.xpose.msra.mxu0 0.0
      %928 = vmatprep.subr.mxu0 0.0
      %929 = vmatpush1.xpose.msra.mxu0 0.0
      %930 = vmatprep.subr.mxu0 0.0
      %931 = vmatpush1.xpose.msra.mxu0 0.0
      %932 = vmatprep.subr.mxu0 0.0
      %933 = vmatpush1.xpose.msra.mxu0 0.0
      %934 = vmatprep.subr.mxu0 0.0
      %935 = vmatpush1.xpose.msra.mxu0 0.0
      %936 = vmatprep.subr.mxu0 0.0
      %937 = vmatpush1.xpose.msra.mxu0 0.0
      %938 = vmatprep.subr.mxu0 0.0
      %939 = vmatpush1.xpose.msra.mxu0 0.0
      %940 = vmatprep.subr.mxu0 0.0
      %941 = vmatpush1.xpose.msra.mxu0 0.0
      %942 = vmatprep.subr.mxu0 0.0
      %943 = vmatpush1.xpose.msra.mxu0 0.0
      %944 = vmatprep.subr.mxu0 0.0
      %945 = vmatpush1.xpose.msra.mxu0 0.0
      %946 = vmatprep.subr.mxu0 0.0
      %947 = vmatpush1.xpose.msra.mxu0 0.0
      %948 = vmatprep.subr.mxu0 0.0
      %949 = vmatpush1.xpose.msra.mxu0 0.0
      %950 = vmatprep.subr.mxu0 0.0
      %951 = vmatpush1.xpose.msra.mxu0 0.0
      %952 = vmatprep.subr.mxu0 0.0
      %953 = vmatpush1.xpose.msra.mxu0 0.0
      %954 = vmatprep.subr.mxu0 0.0
      %955 = vmatpush1.xpose.msra.mxu0 0.0
      %956 = vmatprep.subr.mxu0 0.0
      %957 = vmatpush1.xpose.msra.mxu0 0.0
      %958 = vmatprep.subr.mxu0 0.0
      %959 = vmatpush1.xpose.msra.mxu0 0.0
      %960 = vmatprep.subr.mxu0 0.0
      %961 = vmatpush1.xpose.msra.mxu0 0.0
      %962 = vmatprep.subr.mxu0 0.0
      %963 = vmatpush1.xpose.msra.mxu0 0.0
      %964 = vmatprep.subr.mxu0 0.0
      %965 = vmatpush1.xpose.msra.mxu0 0.0
      %966 = vmatprep.subr.mxu0 0.0
      %967 = vmatpush1.xpose.msra.mxu0 0.0
      %968 = vmatprep.subr.mxu0 0.0
      %969 = vmatpush1.xpose.msra.mxu0 0.0
      %970 = vmatprep.subr.mxu0 0.0
      %971 = vmatpush1.xpose.msra.mxu0 0.0
      %972 = vmatprep.subr.mxu0 0.0
      %973 = vmatpush1.xpose.msra.mxu0 0.0
      %974 = vmatprep.mubr.f32.mxu0 0.0
      %975 = vmatmul.mubr.f32.gmra.mrb[0].mxu0 %v603
      %v976 = vpop.f32.mrb[0].mxu0
      %v977 = vadd.f32 0.0, %v976
      %v978 = vpop.f32.mrb[0].mxu0
      %979 = vdwg.mxu0
      %980 = vmatprep.subr.mxu0 0.0
      %981 = vmatpush1.xpose.msra.mxu0 %v569
      %982 = vmatprep.subr.mxu0 0.0
      %983 = vmatpush1.xpose.msra.mxu0 0.0
      %984 = vmatprep.subr.mxu0 0.0
      %985 = vmatpush1.xpose.msra.mxu0 0.0
      %986 = vmatprep.subr.mxu0 0.0
      %987 = vmatpush1.xpose.msra.mxu0 0.0
      %988 = vmatprep.subr.mxu0 0.0
      %989 = vmatpush1.xpose.msra.mxu0 0.0
      %990 = vmatprep.subr.mxu0 0.0
      %991 = vmatpush1.xpose.msra.mxu0 0.0
      %992 = vmatprep.subr.mxu0 0.0
      %993 = vmatpush1.xpose.msra.mxu0 0.0
      %994 = vmatprep.subr.mxu0 0.0
      %995 = vmatpush1.xpose.msra.mxu0 0.0
      %996 = vmatprep.subr.mxu0 0.0
      %997 = vmatpush1.xpose.msra.mxu0 0.0
      %998 = vmatprep.subr.mxu0 0.0
      %999 = vmatpush1.xpose.msra.mxu0 0.0
      %1000 = vmatprep.subr.mxu0 0.0
      %1001 = vmatpush1.xpose.msra.mxu0 0.0
      %1002 = vmatprep.subr.mxu0 0.0
      %1003 = vmatpush1.xpose.msra.mxu0 0.0
      %1004 = vmatprep.subr.mxu0 0.0
      %1005 = vmatpush1.xpose.msra.mxu0 0.0
      %1006 = vmatprep.subr.mxu0 0.0
      %1007 = vmatpush1.xpose.msra.mxu0 0.0
      %1008 = vmatprep.subr.mxu0 0.0
      %1009 = vmatpush1.xpose.msra.mxu0 0.0
      %1010 = vmatprep.subr.mxu0 0.0
      %1011 = vmatpush1.xpose.msra.mxu0 0.0
      %1012 = vmatprep.subr.mxu0 0.0
      %1013 = vmatpush1.xpose.msra.mxu0 0.0
      %1014 = vmatprep.subr.mxu0 0.0
      %1015 = vmatpush1.xpose.msra.mxu0 0.0
      %1016 = vmatprep.subr.mxu0 0.0
      %1017 = vmatpush1.xpose.msra.mxu0 0.0
      %1018 = vmatprep.subr.mxu0 0.0
      %1019 = vmatpush1.xpose.msra.mxu0 0.0
      %1020 = vmatprep.subr.mxu0 0.0
      %1021 = vmatpush1.xpose.msra.mxu0 0.0
      %1022 = vmatprep.subr.mxu0 0.0
      %1023 = vmatpush1.xpose.msra.mxu0 0.0
      %1024 = vmatprep.subr.mxu0 0.0
      %1025 = vmatpush1.xpose.msra.mxu0 0.0
      %1026 = vmatprep.subr.mxu0 0.0
      %1027 = vmatpush1.xpose.msra.mxu0 0.0
      %1028 = vmatprep.subr.mxu0 0.0
      %1029 = vmatpush1.xpose.msra.mxu0 0.0
      %1030 = vmatprep.subr.mxu0 0.0
      %1031 = vmatpush1.xpose.msra.mxu0 0.0
      %1032 = vmatprep.subr.mxu0 0.0
      %1033 = vmatpush1.xpose.msra.mxu0 0.0
      %1034 = vmatprep.subr.mxu0 0.0
      %1035 = vmatpush1.xpose.msra.mxu0 0.0
      %1036 = vmatprep.subr.mxu0 0.0
      %1037 = vmatpush1.xpose.msra.mxu0 0.0
      %1038 = vmatprep.subr.mxu0 0.0
      %1039 = vmatpush1.xpose.msra.mxu0 0.0
      %1040 = vmatprep.subr.mxu0 0.0
      %1041 = vmatpush1.xpose.msra.mxu0 0.0
      %1042 = vmatprep.subr.mxu0 0.0
      %1043 = vmatpush1.xpose.msra.mxu0 0.0
      %1044 = vmatprep.mubr.f32.mxu0 0.0
      %1045 = vmatmul.mubr.f32.gmra.mrb[0].mxu0 %v617
      %v1046 = vpop.f32.mrb[0].mxu0
      %v1047 = vadd.f32 0.0, %v1046
      %v1048 = vpop.f32.mrb[0].mxu0
      %1049 = vdwg.mxu0
      %1050 = vmatprep.subr.mxu0 0.0
      %1051 = vmatpush1.xpose.msra.mxu0 %v570
      %1052 = vmatprep.subr.mxu0 0.0
      %1053 = vmatpush1.xpose.msra.mxu0 0.0
      %1054 = vmatprep.subr.mxu0 0.0
      %1055 = vmatpush1.xpose.msra.mxu0 0.0
      %1056 = vmatprep.subr.mxu0 0.0
      %1057 = vmatpush1.xpose.msra.mxu0 0.0
      %1058 = vmatprep.subr.mxu0 0.0
      %1059 = vmatpush1.xpose.msra.mxu0 0.0
      %1060 = vmatprep.subr.mxu0 0.0
      %1061 = vmatpush1.xpose.msra.mxu0 0.0
      %1062 = vmatprep.subr.mxu0 0.0
      %1063 = vmatpush1.xpose.msra.mxu0 0.0
      %1064 = vmatprep.subr.mxu0 0.0
      %1065 = vmatpush1.xpose.msra.mxu0 0.0
      %1066 = vmatprep.subr.mxu0 0.0
      %1067 = vmatpush1.xpose.msra.mxu0 0.0
      %1068 = vmatprep.subr.mxu0 0.0
      %1069 = vmatpush1.xpose.msra.mxu0 0.0
      %1070 = vmatprep.subr.mxu0 0.0
      %1071 = vmatpush1.xpose.msra.mxu0 0.0
      %1072 = vmatprep.subr.mxu0 0.0
      %1073 = vmatpush1.xpose.msra.mxu0 0.0
      %1074 = vmatprep.subr.mxu0 0.0
      %1075 = vmatpush1.xpose.msra.mxu0 0.0
      %1076 = vmatprep.subr.mxu0 0.0
      %1077 = vmatpush1.xpose.msra.mxu0 0.0
      %1078 = vmatprep.subr.mxu0 0.0
      %1079 = vmatpush1.xpose.msra.mxu0 0.0
      %1080 = vmatprep.subr.mxu0 0.0
      %1081 = vmatpush1.xpose.msra.mxu0 0.0
      %1082 = vmatprep.subr.mxu0 0.0
      %1083 = vmatpush1.xpose.msra.mxu0 0.0
      %1084 = vmatprep.subr.mxu0 0.0
      %1085 = vmatpush1.xpose.msra.mxu0 0.0
      %1086 = vmatprep.subr.mxu0 0.0
      %1087 = vmatpush1.xpose.msra.mxu0 0.0
      %1088 = vmatprep.subr.mxu0 0.0
      %1089 = vmatpush1.xpose.msra.mxu0 0.0
      %1090 = vmatprep.subr.mxu0 0.0
      %1091 = vmatpush1.xpose.msra.mxu0 0.0
      %1092 = vmatprep.subr.mxu0 0.0
      %1093 = vmatpush1.xpose.msra.mxu0 0.0
      %1094 = vmatprep.subr.mxu0 0.0
      %1095 = vmatpush1.xpose.msra.mxu0 0.0
      %1096 = vmatprep.subr.mxu0 0.0
      %1097 = vmatpush1.xpose.msra.mxu0 0.0
      %1098 = vmatprep.subr.mxu0 0.0
      %1099 = vmatpush1.xpose.msra.mxu0 0.0
      %1100 = vmatprep.subr.mxu0 0.0
      %1101 = vmatpush1.xpose.msra.mxu0 0.0
      %1102 = vmatprep.subr.mxu0 0.0
      %1103 = vmatpush1.xpose.msra.mxu0 0.0
      %1104 = vmatprep.subr.mxu0 0.0
      %1105 = vmatpush1.xpose.msra.mxu0 0.0
      %1106 = vmatprep.subr.mxu0 0.0
      %1107 = vmatpush1.xpose.msra.mxu0 0.0
      %1108 = vmatprep.subr.mxu0 0.0
      %1109 = vmatpush1.xpose.msra.mxu0 0.0
      %1110 = vmatprep.subr.mxu0 0.0
      %1111 = vmatpush1.xpose.msra.mxu0 0.0
      %1112 = vmatprep.subr.mxu0 0.0
      %1113 = vmatpush1.xpose.msra.mxu0 0.0
      %1114 = vmatprep.mubr.f32.mxu0 0.0
      %1115 = vmatmul.mubr.f32.gmra.mrb[0].mxu0 %v619
      %v1116 = vpop.f32.mrb[0].mxu0
      %v1117 = vadd.f32 0.0, %v1116
      %v1118 = vpop.f32.mrb[0].mxu0
      %1119 = vdwg.mxu0
      %1120 = vmatprep.subr.mxu0 0.0
      %1121 = vmatpush1.xpose.msra.mxu0 %v571
      %1122 = vmatprep.subr.mxu0 0.0
      %1123 = vmatpush1.xpose.msra.mxu0 0.0
      %1124 = vmatprep.subr.mxu0 0.0
      %1125 = vmatpush1.xpose.msra.mxu0 0.0
      %1126 = vmatprep.subr.mxu0 0.0
      %1127 = vmatpush1.xpose.msra.mxu0 0.0
      %1128 = vmatprep.subr.mxu0 0.0
      %1129 = vmatpush1.xpose.msra.mxu0 0.0
      %1130 = vmatprep.subr.mxu0 0.0
      %1131 = vmatpush1.xpose.msra.mxu0 0.0
      %1132 = vmatprep.subr.mxu0 0.0
      %1133 = vmatpush1.xpose.msra.mxu0 0.0
      %1134 = vmatprep.subr.mxu0 0.0
      %1135 = vmatpush1.xpose.msra.mxu0 0.0
      %1136 = vmatprep.subr.mxu0 0.0
      %1137 = vmatpush1.xpose.msra.mxu0 0.0
      %1138 = vmatprep.subr.mxu0 0.0
      %1139 = vmatpush1.xpose.msra.mxu0 0.0
      %1140 = vmatprep.subr.mxu0 0.0
      %1141 = vmatpush1.xpose.msra.mxu0 0.0
      %1142 = vmatprep.subr.mxu0 0.0
      %1143 = vmatpush1.xpose.msra.mxu0 0.0
      %1144 = vmatprep.subr.mxu0 0.0
      %1145 = vmatpush1.xpose.msra.mxu0 0.0
      %1146 = vmatprep.subr.mxu0 0.0
      %1147 = vmatpush1.xpose.msra.mxu0 0.0
      %1148 = vmatprep.subr.mxu0 0.0
      %1149 = vmatpush1.xpose.msra.mxu0 0.0
      %1150 = vmatprep.subr.mxu0 0.0
      %1151 = vmatpush1.xpose.msra.mxu0 0.0
      %1152 = vmatprep.subr.mxu0 0.0
      %1153 = vmatpush1.xpose.msra.mxu0 0.0
      %1154 = vmatprep.subr.mxu0 0.0
      %1155 = vmatpush1.xpose.msra.mxu0 0.0
      %1156 = vmatprep.subr.mxu0 0.0
      %1157 = vmatpush1.xpose.msra.mxu0 0.0
      %1158 = vmatprep.subr.mxu0 0.0
      %1159 = vmatpush1.xpose.msra.mxu0 0.0
      %1160 = vmatprep.subr.mxu0 0.0
      %1161 = vmatpush1.xpose.msra.mxu0 0.0
      %1162 = vmatprep.subr.mxu0 0.0
      %1163 = vmatpush1.xpose.msra.mxu0 0.0
      %1164 = vmatprep.subr.mxu0 0.0
      %1165 = vmatpush1.xpose.msra.mxu0 0.0
      %1166 = vmatprep.subr.mxu0 0.0
      %1167 = vmatpush1.xpose.msra.mxu0 0.0
      %1168 = vmatprep.subr.mxu0 0.0
      %1169 = vmatpush1.xpose.msra.mxu0 0.0
      %1170 = vmatprep.subr.mxu0 0.0
      %1171 = vmatpush1.xpose.msra.mxu0 0.0
      %1172 = vmatprep.subr.mxu0 0.0
      %1173 = vmatpush1.xpose.msra.mxu0 0.0
      %1174 = vmatprep.subr.mxu0 0.0
      %1175 = vmatpush1.xpose.msra.mxu0 0.0
      %1176 = vmatprep.subr.mxu0 0.0
      %1177 = vmatpush1.xpose.msra.mxu0 0.0
      %1178 = vmatprep.subr.mxu0 0.0
      %1179 = vmatpush1.xpose.msra.mxu0 0.0
      %1180 = vmatprep.subr.mxu0 0.0
      %1181 = vmatpush1.xpose.msra.mxu0 0.0
      %1182 = vmatprep.subr.mxu0 0.0
      %1183 = vmatpush1.xpose.msra.mxu0 0.0
      %1184 = vmatprep.mubr.f32.mxu0 0.0
      %1185 = vmatmul.mubr.f32.gmra.mrb[0].mxu0 %v621
      %v1186 = vpop.f32.mrb[0].mxu0
      %v1187 = vadd.f32 0.0, %v1186
      %v1188 = vpop.f32.mrb[0].mxu0
      %1189 = vdwg.mxu0
      %v1190 = vlaneseq
      %v1191 = vand.u32 %v1190, 127
      %vm1192 = vcmp.lt.s32.totalorder %v1191, 7
      %v1201 = vrot.slane %v767, 7
      %vm1202 = vcmask 1041409
      %v1203 = vsel %vm1202, %v1201, %v697
      %v1204 = vrot.slane %v837, 6
      %vm1205 = vcmask 1042434
      %v1206 = vsel %vm1205, %v1204, %v1203
      %v1207 = vrot.slane %v907, 5
      %vm1208 = vcmask 1043459
      %v1209 = vsel %vm1208, %v1207, %v1206
      %v1210 = vrot.slane %v977, 4
      %vm1211 = vcmask 1044484
      %v1212 = vsel %vm1211, %v1210, %v1209
      %v1213 = vrot.slane %v1047, 3
      %vm1214 = vcmask 1045509
      %v1215 = vsel %vm1214, %v1213, %v1212
      %v1216 = vrot.slane %v1117, 2
      %vm1217 = vcmask 1046534
      %v1218 = vsel %vm1217, %v1216, %v1215
      %v1219 = vrot.slane %v1187, 1
      %vm1220 = vcmask 1047559
      %v1221 = vsel %vm1220, %v1219, %v1218
      %v1223 = vsel %vm1192, %v1221, -1e+30
      %vm1224 = vcmask 64512
      %v1225 = vsel %vm1224, %v1223, -inf
      %1226 = vmax.xlane.f32.xlu0 %v1225
      %v1227 = vpop.xlane.xlu0 %1226
      %v1228 = vsub.f32 %v1223, %v1227
      %v1229 = vmul.f32 %v1228, 1.442695
      %v1230 = vpow.pop %v1229
      %v1231 = vsel %vm1224, %v1230, 0.0
      %1232 = vadd.xlane.f32.xlu0 %v1231
      %v1233 = vpop.xlane.xlu0 %1232
      %v1234 = vrcp.pop %v1233
      %v1235 = vmul.f32 %v1230, %v1234
      %v1237 = vcombine.high %v1235, %v1235
      %v1239 = vunpack.c.l.s4 1966171168
      %v1240 = vunpack.c.0.s8 %v1239
      %v1241 = vlaneseq
      %v1242 = vshrl.u32 %v1241, 7
      %v1243 = vsub.s32 %v1240, %v1242
      %v1244 = vrot.slane %v1235, %v1243
      %v1246 = vunpack.c.l.s4 1966171168
      %v1247 = vunpack.c.0.s8 %v1246
      %v1248 = vlaneseq
      %v1249 = vshrl.u32 %v1248, 7
      %v1250 = vsub.s32 %v1247, %v1249
      %v1251 = vrot.slane %v1237, %v1250
      %v1252 = vcombine.high %v1244, %v1244
      %v1253 = vcombine.high %v1251, %v1251
      %v1255 = vunpack.c.l.s4 1966171168
      %v1256 = vunpack.c.0.s8 %v1255
      %v1257 = vlaneseq
      %v1258 = vshrl.u32 %v1257, 7
      %v1259 = vsub.s32 %v1256, %v1258
      %v1260 = vrot.slane %v1244, %v1259
      %v1262 = vunpack.c.l.s4 1966171168
      %v1263 = vunpack.c.0.s8 %v1262
      %v1264 = vlaneseq
      %v1265 = vshrl.u32 %v1264, 7
      %v1266 = vsub.s32 %v1263, %v1265
      %v1267 = vrot.slane %v1251, %v1266
      %v1269 = vunpack.c.l.s4 1966171168
      %v1270 = vunpack.c.0.s8 %v1269
      %v1271 = vlaneseq
      %v1272 = vshrl.u32 %v1271, 7
      %v1273 = vsub.s32 %v1270, %v1272
      %v1274 = vrot.slane %v1252, %v1273
      %v1276 = vunpack.c.l.s4 1966171168
      %v1277 = vunpack.c.0.s8 %v1276
      %v1278 = vlaneseq
      %v1279 = vshrl.u32 %v1278, 7
      %v1280 = vsub.s32 %v1277, %v1279
      %v1281 = vrot.slane %v1253, %v1280
      %v1282 = vcombine.high %v1260, %v1260
      %v1283 = vcombine.high %v1267, %v1267
      %v1284 = vcombine.high %v1274, %v1274
      %v1285 = vcombine.high %v1281, %v1281
      %v1286 = vsel %vm1224, %v1260, 0
      %1288 = vmatprep.subr.mxu0 0.0
      %1289 = vmatpush1.msra.mxu0 %v564
      %1290 = vmatprep.subr.mxu0 0.0
      %1291 = vmatpush1.msra.mxu0 0.0
      %1292 = vmatprep.subr.mxu0 0.0
      %1293 = vmatpush1.msra.mxu0 0.0
      %1294 = vmatprep.subr.mxu0 0.0
      %1295 = vmatpush1.msra.mxu0 0.0
      %1296 = vmatprep.subr.mxu0 0.0
      %1297 = vmatpush1.msra.mxu0 0.0
      %1298 = vmatprep.subr.mxu0 0.0
      %1299 = vmatpush1.msra.mxu0 0.0
      %1300 = vmatprep.subr.mxu0 0.0
      %1301 = vmatpush1.msra.mxu0 0.0
      %1302 = vmatprep.subr.mxu0 0.0
      %1303 = vmatpush1.msra.mxu0 0.0
      %1304 = vmatprep.subr.mxu0 0.0
      %1305 = vmatpush1.msra.mxu0 0.0
      %1306 = vmatprep.subr.mxu0 0.0
      %1307 = vmatpush1.msra.mxu0 0.0
      %1308 = vmatprep.subr.mxu0 0.0
      %1309 = vmatpush1.msra.mxu0 0.0
      %1310 = vmatprep.subr.mxu0 0.0
      %1311 = vmatpush1.msra.mxu0 0.0
      %1312 = vmatprep.subr.mxu0 0.0
      %1313 = vmatpush1.msra.mxu0 0.0
      %1314 = vmatprep.subr.mxu0 0.0
      %1315 = vmatpush1.msra.mxu0 0.0
      %1316 = vmatprep.subr.mxu0 0.0
      %1317 = vmatpush1.msra.mxu0 0.0
      %1318 = vmatprep.subr.mxu0 0.0
      %1319 = vmatpush1.msra.mxu0 0.0
      %1320 = vmatprep.subr.mxu0 0.0
      %1321 = vmatpush1.msra.mxu0 0.0
      %1322 = vmatprep.subr.mxu0 0.0
      %1323 = vmatpush1.msra.mxu0 0.0
      %1324 = vmatprep.subr.mxu0 0.0
      %1325 = vmatpush1.msra.mxu0 0.0
      %1326 = vmatprep.subr.mxu0 0.0
      %1327 = vmatpush1.msra.mxu0 0.0
      %1328 = vmatprep.subr.mxu0 0.0
      %1329 = vmatpush1.msra.mxu0 0.0
      %1330 = vmatprep.subr.mxu0 0.0
      %1331 = vmatpush1.msra.mxu0 0.0
      %1332 = vmatprep.subr.mxu0 0.0
      %1333 = vmatpush1.msra.mxu0 0.0
      %1334 = vmatprep.subr.mxu0 0.0
      %1335 = vmatpush1.msra.mxu0 0.0
      %1336 = vmatprep.subr.mxu0 0.0
      %1337 = vmatpush1.msra.mxu0 0.0
      %1338 = vmatprep.subr.mxu0 0.0
      %1339 = vmatpush1.msra.mxu0 0.0
      %1340 = vmatprep.subr.mxu0 0.0
      %1341 = vmatpush1.msra.mxu0 0.0
      %1342 = vmatprep.subr.mxu0 0.0
      %1343 = vmatpush1.msra.mxu0 0.0
      %1344 = vmatprep.subr.mxu0 0.0
      %1345 = vmatpush1.msra.mxu0 0.0
      %1346 = vmatprep.subr.mxu0 0.0
      %1347 = vmatpush1.msra.mxu0 0.0
      %1348 = vmatprep.subr.mxu0 0.0
      %1349 = vmatpush1.msra.mxu0 0.0
      %1350 = vmatprep.subr.mxu0 0.0
      %1351 = vmatpush1.msra.mxu0 0.0
      %1352 = vmatprep.mubr.f32.mxu0 0.0
      %1353 = vmatmul.mubr.f32.gmra.mrb[0].mxu0 %v1286
      %v1354 = vpop.f32.mrb[0].mxu0
      %v1355 = vadd.f32 0.0, %v1354
      %v1356 = vpop.f32.mrb[0].mxu0
      %1357 = vdwg.mxu0
      %v1358 = vsel %vm1224, %v1274, 0
      %1360 = vmatprep.subr.mxu0 0.0
      %1361 = vmatpush1.msra.mxu0 %v565
      %1362 = vmatprep.subr.mxu0 0.0
      %1363 = vmatpush1.msra.mxu0 0.0
      %1364 = vmatprep.subr.mxu0 0.0
      %1365 = vmatpush1.msra.mxu0 0.0
      %1366 = vmatprep.subr.mxu0 0.0
      %1367 = vmatpush1.msra.mxu0 0.0
      %1368 = vmatprep.subr.mxu0 0.0
      %1369 = vmatpush1.msra.mxu0 0.0
      %1370 = vmatprep.subr.mxu0 0.0
      %1371 = vmatpush1.msra.mxu0 0.0
      %1372 = vmatprep.subr.mxu0 0.0
      %1373 = vmatpush1.msra.mxu0 0.0
      %1374 = vmatprep.subr.mxu0 0.0
      %1375 = vmatpush1.msra.mxu0 0.0
      %1376 = vmatprep.subr.mxu0 0.0
      %1377 = vmatpush1.msra.mxu0 0.0
      %1378 = vmatprep.subr.mxu0 0.0
      %1379 = vmatpush1.msra.mxu0 0.0
      %1380 = vmatprep.subr.mxu0 0.0
      %1381 = vmatpush1.msra.mxu0 0.0
      %1382 = vmatprep.subr.mxu0 0.0
      %1383 = vmatpush1.msra.mxu0 0.0
      %1384 = vmatprep.subr.mxu0 0.0
      %1385 = vmatpush1.msra.mxu0 0.0
      %1386 = vmatprep.subr.mxu0 0.0
      %1387 = vmatpush1.msra.mxu0 0.0
      %1388 = vmatprep.subr.mxu0 0.0
      %1389 = vmatpush1.msra.mxu0 0.0
      %1390 = vmatprep.subr.mxu0 0.0
      %1391 = vmatpush1.msra.mxu0 0.0
      %1392 = vmatprep.subr.mxu0 0.0
      %1393 = vmatpush1.msra.mxu0 0.0
      %1394 = vmatprep.subr.mxu0 0.0
      %1395 = vmatpush1.msra.mxu0 0.0
      %1396 = vmatprep.subr.mxu0 0.0
      %1397 = vmatpush1.msra.mxu0 0.0
      %1398 = vmatprep.subr.mxu0 0.0
      %1399 = vmatpush1.msra.mxu0 0.0
      %1400 = vmatprep.subr.mxu0 0.0
      %1401 = vmatpush1.msra.mxu0 0.0
      %1402 = vmatprep.subr.mxu0 0.0
      %1403 = vmatpush1.msra.mxu0 0.0
      %1404 = vmatprep.subr.mxu0 0.0
      %1405 = vmatpush1.msra.mxu0 0.0
      %1406 = vmatprep.subr.mxu0 0.0
      %1407 = vmatpush1.msra.mxu0 0.0
      %1408 = vmatprep.subr.mxu0 0.0
      %1409 = vmatpush1.msra.mxu0 0.0
      %1410 = vmatprep.subr.mxu0 0.0
      %1411 = vmatpush1.msra.mxu0 0.0
      %1412 = vmatprep.subr.mxu0 0.0
      %1413 = vmatpush1.msra.mxu0 0.0
      %1414 = vmatprep.subr.mxu0 0.0
      %1415 = vmatpush1.msra.mxu0 0.0
      %1416 = vmatprep.subr.mxu0 0.0
      %1417 = vmatpush1.msra.mxu0 0.0
      %1418 = vmatprep.subr.mxu0 0.0
      %1419 = vmatpush1.msra.mxu0 0.0
      %1420 = vmatprep.subr.mxu0 0.0
      %1421 = vmatpush1.msra.mxu0 0.0
      %1422 = vmatprep.subr.mxu0 0.0
      %1423 = vmatpush1.msra.mxu0 0.0
      %1424 = vmatprep.mubr.f32.mxu0 0.0
      %1425 = vmatmul.mubr.f32.gmra.mrb[0].mxu0 %v1358
      %v1426 = vpop.f32.mrb[0].mxu0
      %v1427 = vadd.f32 0.0, %v1426
      %v1428 = vpop.f32.mrb[0].mxu0
      %1429 = vdwg.mxu0
      %v1430 = vsel %vm1224, %v1282, 0
      %1432 = vmatprep.subr.mxu0 0.0
      %1433 = vmatpush1.msra.mxu0 %v566
      %1434 = vmatprep.subr.mxu0 0.0
      %1435 = vmatpush1.msra.mxu0 0.0
      %1436 = vmatprep.subr.mxu0 0.0
      %1437 = vmatpush1.msra.mxu0 0.0
      %1438 = vmatprep.subr.mxu0 0.0
      %1439 = vmatpush1.msra.mxu0 0.0
      %1440 = vmatprep.subr.mxu0 0.0
      %1441 = vmatpush1.msra.mxu0 0.0
      %1442 = vmatprep.subr.mxu0 0.0
      %1443 = vmatpush1.msra.mxu0 0.0
      %1444 = vmatprep.subr.mxu0 0.0
      %1445 = vmatpush1.msra.mxu0 0.0
      %1446 = vmatprep.subr.mxu0 0.0
      %1447 = vmatpush1.msra.mxu0 0.0
      %1448 = vmatprep.subr.mxu0 0.0
      %1449 = vmatpush1.msra.mxu0 0.0
      %1450 = vmatprep.subr.mxu0 0.0
      %1451 = vmatpush1.msra.mxu0 0.0
      %1452 = vmatprep.subr.mxu0 0.0
      %1453 = vmatpush1.msra.mxu0 0.0
      %1454 = vmatprep.subr.mxu0 0.0
      %1455 = vmatpush1.msra.mxu0 0.0
      %1456 = vmatprep.subr.mxu0 0.0
      %1457 = vmatpush1.msra.mxu0 0.0
      %1458 = vmatprep.subr.mxu0 0.0
      %1459 = vmatpush1.msra.mxu0 0.0
      %1460 = vmatprep.subr.mxu0 0.0
      %1461 = vmatpush1.msra.mxu0 0.0
      %1462 = vmatprep.subr.mxu0 0.0
      %1463 = vmatpush1.msra.mxu0 0.0
      %1464 = vmatprep.subr.mxu0 0.0
      %1465 = vmatpush1.msra.mxu0 0.0
      %1466 = vmatprep.subr.mxu0 0.0
      %1467 = vmatpush1.msra.mxu0 0.0
      %1468 = vmatprep.subr.mxu0 0.0
      %1469 = vmatpush1.msra.mxu0 0.0
      %1470 = vmatprep.subr.mxu0 0.0
      %1471 = vmatpush1.msra.mxu0 0.0
      %1472 = vmatprep.subr.mxu0 0.0
      %1473 = vmatpush1.msra.mxu0 0.0
      %1474 = vmatprep.subr.mxu0 0.0
      %1475 = vmatpush1.msra.mxu0 0.0
      %1476 = vmatprep.subr.mxu0 0.0
      %1477 = vmatpush1.msra.mxu0 0.0
      %1478 = vmatprep.subr.mxu0 0.0
      %1479 = vmatpush1.msra.mxu0 0.0
      %1480 = vmatprep.subr.mxu0 0.0
      %1481 = vmatpush1.msra.mxu0 0.0
      %1482 = vmatprep.subr.mxu0 0.0
      %1483 = vmatpush1.msra.mxu0 0.0
      %1484 = vmatprep.subr.mxu0 0.0
      %1485 = vmatpush1.msra.mxu0 0.0
      %1486 = vmatprep.subr.mxu0 0.0
      %1487 = vmatpush1.msra.mxu0 0.0
      %1488 = vmatprep.subr.mxu0 0.0
      %1489 = vmatpush1.msra.mxu0 0.0
      %1490 = vmatprep.subr.mxu0 0.0
      %1491 = vmatpush1.msra.mxu0 0.0
      %1492 = vmatprep.subr.mxu0 0.0
      %1493 = vmatpush1.msra.mxu0 0.0
      %1494 = vmatprep.subr.mxu0 0.0
      %1495 = vmatpush1.msra.mxu0 0.0
      %1496 = vmatprep.mubr.f32.mxu0 0.0
      %1497 = vmatmul.mubr.f32.gmra.mrb[0].mxu0 %v1430
      %v1498 = vpop.f32.mrb[0].mxu0
      %v1499 = vadd.f32 0.0, %v1498
      %v1500 = vpop.f32.mrb[0].mxu0
      %1501 = vdwg.mxu0
      %v1502 = vsel %vm1224, %v1284, 0
      %1504 = vmatprep.subr.mxu0 0.0
      %1505 = vmatpush1.msra.mxu0 %v567
      %1506 = vmatprep.subr.mxu0 0.0
      %1507 = vmatpush1.msra.mxu0 0.0
      %1508 = vmatprep.subr.mxu0 0.0
      %1509 = vmatpush1.msra.mxu0 0.0
      %1510 = vmatprep.subr.mxu0 0.0
      %1511 = vmatpush1.msra.mxu0 0.0
      %1512 = vmatprep.subr.mxu0 0.0
      %1513 = vmatpush1.msra.mxu0 0.0
      %1514 = vmatprep.subr.mxu0 0.0
      %1515 = vmatpush1.msra.mxu0 0.0
      %1516 = vmatprep.subr.mxu0 0.0
      %1517 = vmatpush1.msra.mxu0 0.0
      %1518 = vmatprep.subr.mxu0 0.0
      %1519 = vmatpush1.msra.mxu0 0.0
      %1520 = vmatprep.subr.mxu0 0.0
      %1521 = vmatpush1.msra.mxu0 0.0
      %1522 = vmatprep.subr.mxu0 0.0
      %1523 = vmatpush1.msra.mxu0 0.0
      %1524 = vmatprep.subr.mxu0 0.0
      %1525 = vmatpush1.msra.mxu0 0.0
      %1526 = vmatprep.subr.mxu0 0.0
      %1527 = vmatpush1.msra.mxu0 0.0
      %1528 = vmatprep.subr.mxu0 0.0
      %1529 = vmatpush1.msra.mxu0 0.0
      %1530 = vmatprep.subr.mxu0 0.0
      %1531 = vmatpush1.msra.mxu0 0.0
      %1532 = vmatprep.subr.mxu0 0.0
      %1533 = vmatpush1.msra.mxu0 0.0
      %1534 = vmatprep.subr.mxu0 0.0
      %1535 = vmatpush1.msra.mxu0 0.0
      %1536 = vmatprep.subr.mxu0 0.0
      %1537 = vmatpush1.msra.mxu0 0.0
      %1538 = vmatprep.subr.mxu0 0.0
      %1539 = vmatpush1.msra.mxu0 0.0
      %1540 = vmatprep.subr.mxu0 0.0
      %1541 = vmatpush1.msra.mxu0 0.0
      %1542 = vmatprep.subr.mxu0 0.0
      %1543 = vmatpush1.msra.mxu0 0.0
      %1544 = vmatprep.subr.mxu0 0.0
      %1545 = vmatpush1.msra.mxu0 0.0
      %1546 = vmatprep.subr.mxu0 0.0
      %1547 = vmatpush1.msra.mxu0 0.0
      %1548 = vmatprep.subr.mxu0 0.0
      %1549 = vmatpush1.msra.mxu0 0.0
      %1550 = vmatprep.subr.mxu0 0.0
      %1551 = vmatpush1.msra.mxu0 0.0
      %1552 = vmatprep.subr.mxu0 0.0
      %1553 = vmatpush1.msra.mxu0 0.0
      %1554 = vmatprep.subr.mxu0 0.0
      %1555 = vmatpush1.msra.mxu0 0.0
      %1556 = vmatprep.subr.mxu0 0.0
      %1557 = vmatpush1.msra.mxu0 0.0
      %1558 = vmatprep.subr.mxu0 0.0
      %1559 = vmatpush1.msra.mxu0 0.0
      %1560 = vmatprep.subr.mxu0 0.0
      %1561 = vmatpush1.msra.mxu0 0.0
      %1562 = vmatprep.subr.mxu0 0.0
      %1563 = vmatpush1.msra.mxu0 0.0
      %1564 = vmatprep.subr.mxu0 0.0
      %1565 = vmatpush1.msra.mxu0 0.0
      %1566 = vmatprep.subr.mxu0 0.0
      %1567 = vmatpush1.msra.mxu0 0.0
      %1568 = vmatprep.mubr.f32.mxu0 0.0
      %1569 = vmatmul.mubr.f32.gmra.mrb[0].mxu0 %v1502
      %v1570 = vpop.f32.mrb[0].mxu0
      %v1571 = vadd.f32 0.0, %v1570
      %v1572 = vpop.f32.mrb[0].mxu0
      %1573 = vdwg.mxu0
      %v1574 = vsel %vm1224, %v1267, 0
      %1576 = vmatprep.subr.mxu0 0.0
      %1577 = vmatpush1.msra.mxu0 %v568
      %1578 = vmatprep.subr.mxu0 0.0
      %1579 = vmatpush1.msra.mxu0 0.0
      %1580 = vmatprep.subr.mxu0 0.0
      %1581 = vmatpush1.msra.mxu0 0.0
      %1582 = vmatprep.subr.mxu0 0.0
      %1583 = vmatpush1.msra.mxu0 0.0
      %1584 = vmatprep.subr.mxu0 0.0
      %1585 = vmatpush1.msra.mxu0 0.0
      %1586 = vmatprep.subr.mxu0 0.0
      %1587 = vmatpush1.msra.mxu0 0.0
      %1588 = vmatprep.subr.mxu0 0.0
      %1589 = vmatpush1.msra.mxu0 0.0
      %1590 = vmatprep.subr.mxu0 0.0
      %1591 = vmatpush1.msra.mxu0 0.0
      %1592 = vmatprep.subr.mxu0 0.0
      %1593 = vmatpush1.msra.mxu0 0.0
      %1594 = vmatprep.subr.mxu0 0.0
      %1595 = vmatpush1.msra.mxu0 0.0
      %1596 = vmatprep.subr.mxu0 0.0
      %1597 = vmatpush1.msra.mxu0 0.0
      %1598 = vmatprep.subr.mxu0 0.0
      %1599 = vmatpush1.msra.mxu0 0.0
      %1600 = vmatprep.subr.mxu0 0.0
      %1601 = vmatpush1.msra.mxu0 0.0
      %1602 = vmatprep.subr.mxu0 0.0
      %1603 = vmatpush1.msra.mxu0 0.0
      %1604 = vmatprep.subr.mxu0 0.0
      %1605 = vmatpush1.msra.mxu0 0.0
      %1606 = vmatprep.subr.mxu0 0.0
      %1607 = vmatpush1.msra.mxu0 0.0
      %1608 = vmatprep.subr.mxu0 0.0
      %1609 = vmatpush1.msra.mxu0 0.0
      %1610 = vmatprep.subr.mxu0 0.0
      %1611 = vmatpush1.msra.mxu0 0.0
      %1612 = vmatprep.subr.mxu0 0.0
      %1613 = vmatpush1.msra.mxu0 0.0
      %1614 = vmatprep.subr.mxu0 0.0
      %1615 = vmatpush1.msra.mxu0 0.0
      %1616 = vmatprep.subr.mxu0 0.0
      %1617 = vmatpush1.msra.mxu0 0.0
      %1618 = vmatprep.subr.mxu0 0.0
      %1619 = vmatpush1.msra.mxu0 0.0
      %1620 = vmatprep.subr.mxu0 0.0
      %1621 = vmatpush1.msra.mxu0 0.0
      %1622 = vmatprep.subr.mxu0 0.0
      %1623 = vmatpush1.msra.mxu0 0.0
      %1624 = vmatprep.subr.mxu0 0.0
      %1625 = vmatpush1.msra.mxu0 0.0
      %1626 = vmatprep.subr.mxu0 0.0
      %1627 = vmatpush1.msra.mxu0 0.0
      %1628 = vmatprep.subr.mxu0 0.0
      %1629 = vmatpush1.msra.mxu0 0.0
      %1630 = vmatprep.subr.mxu0 0.0
      %1631 = vmatpush1.msra.mxu0 0.0
      %1632 = vmatprep.subr.mxu0 0.0
      %1633 = vmatpush1.msra.mxu0 0.0
      %1634 = vmatprep.subr.mxu0 0.0
      %1635 = vmatpush1.msra.mxu0 0.0
      %1636 = vmatprep.subr.mxu0 0.0
      %1637 = vmatpush1.msra.mxu0 0.0
      %1638 = vmatprep.subr.mxu0 0.0
      %1639 = vmatpush1.msra.mxu0 0.0
      %1640 = vmatprep.mubr.f32.mxu0 0.0
      %1641 = vmatmul.mubr.f32.gmra.mrb[0].mxu0 %v1574
      %v1642 = vpop.f32.mrb[0].mxu0
      %v1643 = vadd.f32 0.0, %v1642
      %v1644 = vpop.f32.mrb[0].mxu0
      %1645 = vdwg.mxu0
      %v1646 = vsel %vm1224, %v1281, 0
      %1648 = vmatprep.subr.mxu0 0.0
      %1649 = vmatpush1.msra.mxu0 %v569
      %1650 = vmatprep.subr.mxu0 0.0
      %1651 = vmatpush1.msra.mxu0 0.0
      %1652 = vmatprep.subr.mxu0 0.0
      %1653 = vmatpush1.msra.mxu0 0.0
      %1654 = vmatprep.subr.mxu0 0.0
      %1655 = vmatpush1.msra.mxu0 0.0
      %1656 = vmatprep.subr.mxu0 0.0
      %1657 = vmatpush1.msra.mxu0 0.0
      %1658 = vmatprep.subr.mxu0 0.0
      %1659 = vmatpush1.msra.mxu0 0.0
      %1660 = vmatprep.subr.mxu0 0.0
      %1661 = vmatpush1.msra.mxu0 0.0
      %1662 = vmatprep.subr.mxu0 0.0
      %1663 = vmatpush1.msra.mxu0 0.0
      %1664 = vmatprep.subr.mxu0 0.0
      %1665 = vmatpush1.msra.mxu0 0.0
      %1666 = vmatprep.subr.mxu0 0.0
      %1667 = vmatpush1.msra.mxu0 0.0
      %1668 = vmatprep.subr.mxu0 0.0
      %1669 = vmatpush1.msra.mxu0 0.0
      %1670 = vmatprep.subr.mxu0 0.0
      %1671 = vmatpush1.msra.mxu0 0.0
      %1672 = vmatprep.subr.mxu0 0.0
      %1673 = vmatpush1.msra.mxu0 0.0
      %1674 = vmatprep.subr.mxu0 0.0
      %1675 = vmatpush1.msra.mxu0 0.0
      %1676 = vmatprep.subr.mxu0 0.0
      %1677 = vmatpush1.msra.mxu0 0.0
      %1678 = vmatprep.subr.mxu0 0.0
      %1679 = vmatpush1.msra.mxu0 0.0
      %1680 = vmatprep.subr.mxu0 0.0
      %1681 = vmatpush1.msra.mxu0 0.0
      %1682 = vmatprep.subr.mxu0 0.0
      %1683 = vmatpush1.msra.mxu0 0.0
      %1684 = vmatprep.subr.mxu0 0.0
      %1685 = vmatpush1.msra.mxu0 0.0
      %1686 = vmatprep.subr.mxu0 0.0
      %1687 = vmatpush1.msra.mxu0 0.0
      %1688 = vmatprep.subr.mxu0 0.0
      %1689 = vmatpush1.msra.mxu0 0.0
      %1690 = vmatprep.subr.mxu0 0.0
      %1691 = vmatpush1.msra.mxu0 0.0
      %1692 = vmatprep.subr.mxu0 0.0
      %1693 = vmatpush1.msra.mxu0 0.0
      %1694 = vmatprep.subr.mxu0 0.0
      %1695 = vmatpush1.msra.mxu0 0.0
      %1696 = vmatprep.subr.mxu0 0.0
      %1697 = vmatpush1.msra.mxu0 0.0
      %1698 = vmatprep.subr.mxu0 0.0
      %1699 = vmatpush1.msra.mxu0 0.0
      %1700 = vmatprep.subr.mxu0 0.0
      %1701 = vmatpush1.msra.mxu0 0.0
      %1702 = vmatprep.subr.mxu0 0.0
      %1703 = vmatpush1.msra.mxu0 0.0
      %1704 = vmatprep.subr.mxu0 0.0
      %1705 = vmatpush1.msra.mxu0 0.0
      %1706 = vmatprep.subr.mxu0 0.0
      %1707 = vmatpush1.msra.mxu0 0.0
      %1708 = vmatprep.subr.mxu0 0.0
      %1709 = vmatpush1.msra.mxu0 0.0
      %1710 = vmatprep.subr.mxu0 0.0
      %1711 = vmatpush1.msra.mxu0 0.0
      %1712 = vmatprep.mubr.f32.mxu0 0.0
      %1713 = vmatmul.mubr.f32.gmra.mrb[0].mxu0 %v1646
      %v1714 = vpop.f32.mrb[0].mxu0
      %v1715 = vadd.f32 0.0, %v1714
      %v1716 = vpop.f32.mrb[0].mxu0
      %1717 = vdwg.mxu0
      %v1718 = vsel %vm1224, %v1283, 0
      %1720 = vmatprep.subr.mxu0 0.0
      %1721 = vmatpush1.msra.mxu0 %v570
      %1722 = vmatprep.subr.mxu0 0.0
      %1723 = vmatpush1.msra.mxu0 0.0
      %1724 = vmatprep.subr.mxu0 0.0
      %1725 = vmatpush1.msra.mxu0 0.0
      %1726 = vmatprep.subr.mxu0 0.0
      %1727 = vmatpush1.msra.mxu0 0.0
      %1728 = vmatprep.subr.mxu0 0.0
      %1729 = vmatpush1.msra.mxu0 0.0
      %1730 = vmatprep.subr.mxu0 0.0
      %1731 = vmatpush1.msra.mxu0 0.0
      %1732 = vmatprep.subr.mxu0 0.0
      %1733 = vmatpush1.msra.mxu0 0.0
      %1734 = vmatprep.subr.mxu0 0.0
      %1735 = vmatpush1.msra.mxu0 0.0
      %1736 = vmatprep.subr.mxu0 0.0
      %1737 = vmatpush1.msra.mxu0 0.0
      %1738 = vmatprep.subr.mxu0 0.0
      %1739 = vmatpush1.msra.mxu0 0.0
      %1740 = vmatprep.subr.mxu0 0.0
      %1741 = vmatpush1.msra.mxu0 0.0
      %1742 = vmatprep.subr.mxu0 0.0
      %1743 = vmatpush1.msra.mxu0 0.0
      %1744 = vmatprep.subr.mxu0 0.0
      %1745 = vmatpush1.msra.mxu0 0.0
      %1746 = vmatprep.subr.mxu0 0.0
      %1747 = vmatpush1.msra.mxu0 0.0
      %1748 = vmatprep.subr.mxu0 0.0
      %1749 = vmatpush1.msra.mxu0 0.0
      %1750 = vmatprep.subr.mxu0 0.0
      %1751 = vmatpush1.msra.mxu0 0.0
      %1752 = vmatprep.subr.mxu0 0.0
      %1753 = vmatpush1.msra.mxu0 0.0
      %1754 = vmatprep.subr.mxu0 0.0
      %1755 = vmatpush1.msra.mxu0 0.0
      %1756 = vmatprep.subr.mxu0 0.0
      %1757 = vmatpush1.msra.mxu0 0.0
      %1758 = vmatprep.subr.mxu0 0.0
      %1759 = vmatpush1.msra.mxu0 0.0
      %1760 = vmatprep.subr.mxu0 0.0
      %1761 = vmatpush1.msra.mxu0 0.0
      %1762 = vmatprep.subr.mxu0 0.0
      %1763 = vmatpush1.msra.mxu0 0.0
      %1764 = vmatprep.subr.mxu0 0.0
      %1765 = vmatpush1.msra.mxu0 0.0
      %1766 = vmatprep.subr.mxu0 0.0
      %1767 = vmatpush1.msra.mxu0 0.0
      %1768 = vmatprep.subr.mxu0 0.0
      %1769 = vmatpush1.msra.mxu0 0.0
      %1770 = vmatprep.subr.mxu0 0.0
      %1771 = vmatpush1.msra.mxu0 0.0
      %1772 = vmatprep.subr.mxu0 0.0
      %1773 = vmatpush1.msra.mxu0 0.0
      %1774 = vmatprep.subr.mxu0 0.0
      %1775 = vmatpush1.msra.mxu0 0.0
      %1776 = vmatprep.subr.mxu0 0.0
      %1777 = vmatpush1.msra.mxu0 0.0
      %1778 = vmatprep.subr.mxu0 0.0
      %1779 = vmatpush1.msra.mxu0 0.0
      %1780 = vmatprep.subr.mxu0 0.0
      %1781 = vmatpush1.msra.mxu0 0.0
      %1782 = vmatprep.subr.mxu0 0.0
      %1783 = vmatpush1.msra.mxu0 0.0
      %1784 = vmatprep.mubr.f32.mxu0 0.0
      %1785 = vmatmul.mubr.f32.gmra.mrb[0].mxu0 %v1718
      %v1786 = vpop.f32.mrb[0].mxu0
      %v1787 = vadd.f32 0.0, %v1786
      %v1788 = vpop.f32.mrb[0].mxu0
      %1789 = vdwg.mxu0
      %v1790 = vsel %vm1224, %v1285, 0
      %1792 = vmatprep.subr.mxu0 0.0
      %1793 = vmatpush1.msra.mxu0 %v571
      %1794 = vmatprep.subr.mxu0 0.0
      %1795 = vmatpush1.msra.mxu0 0.0
      %1796 = vmatprep.subr.mxu0 0.0
      %1797 = vmatpush1.msra.mxu0 0.0
      %1798 = vmatprep.subr.mxu0 0.0
      %1799 = vmatpush1.msra.mxu0 0.0
      %1800 = vmatprep.subr.mxu0 0.0
      %1801 = vmatpush1.msra.mxu0 0.0
      %1802 = vmatprep.subr.mxu0 0.0
      %1803 = vmatpush1.msra.mxu0 0.0
      %1804 = vmatprep.subr.mxu0 0.0
      %1805 = vmatpush1.msra.mxu0 0.0
      %1806 = vmatprep.subr.mxu0 0.0
      %1807 = vmatpush1.msra.mxu0 0.0
      %1808 = vmatprep.subr.mxu0 0.0
      %1809 = vmatpush1.msra.mxu0 0.0
      %1810 = vmatprep.subr.mxu0 0.0
      %1811 = vmatpush1.msra.mxu0 0.0
      %1812 = vmatprep.subr.mxu0 0.0
      %1813 = vmatpush1.msra.mxu0 0.0
      %1814 = vmatprep.subr.mxu0 0.0
      %1815 = vmatpush1.msra.mxu0 0.0
      %1816 = vmatprep.subr.mxu0 0.0
      %1817 = vmatpush1.msra.mxu0 0.0
      %1818 = vmatprep.subr.mxu0 0.0
      %1819 = vmatpush1.msra.mxu0 0.0
      %1820 = vmatprep.subr.mxu0 0.0
      %1821 = vmatpush1.msra.mxu0 0.0
      %1822 = vmatprep.subr.mxu0 0.0
      %1823 = vmatpush1.msra.mxu0 0.0
      %1824 = vmatprep.subr.mxu0 0.0
      %1825 = vmatpush1.msra.mxu0 0.0
      %1826 = vmatprep.subr.mxu0 0.0
      %1827 = vmatpush1.msra.mxu0 0.0
      %1828 = vmatprep.subr.mxu0 0.0
      %1829 = vmatpush1.msra.mxu0 0.0
      %1830 = vmatprep.subr.mxu0 0.0
      %1831 = vmatpush1.msra.mxu0 0.0
      %1832 = vmatprep.subr.mxu0 0.0
      %1833 = vmatpush1.msra.mxu0 0.0
      %1834 = vmatprep.subr.mxu0 0.0
      %1835 = vmatpush1.msra.mxu0 0.0
      %1836 = vmatprep.subr.mxu0 0.0
      %1837 = vmatpush1.msra.mxu0 0.0
      %1838 = vmatprep.subr.mxu0 0.0
      %1839 = vmatpush1.msra.mxu0 0.0
      %1840 = vmatprep.subr.mxu0 0.0
      %1841 = vmatpush1.msra.mxu0 0.0
      %1842 = vmatprep.subr.mxu0 0.0
      %1843 = vmatpush1.msra.mxu0 0.0
      %1844 = vmatprep.subr.mxu0 0.0
      %1845 = vmatpush1.msra.mxu0 0.0
      %1846 = vmatprep.subr.mxu0 0.0
      %1847 = vmatpush1.msra.mxu0 0.0
      %1848 = vmatprep.subr.mxu0 0.0
      %1849 = vmatpush1.msra.mxu0 0.0
      %1850 = vmatprep.subr.mxu0 0.0
      %1851 = vmatpush1.msra.mxu0 0.0
      %1852 = vmatprep.subr.mxu0 0.0
      %1853 = vmatpush1.msra.mxu0 0.0
      %1854 = vmatprep.subr.mxu0 0.0
      %1855 = vmatpush1.msra.mxu0 0.0
      %1856 = vmatprep.mubr.f32.mxu0 0.0
      %1857 = vmatmul.mubr.f32.gmra.mrb[0].mxu0 %v1790
      %v1858 = vpop.f32.mrb[0].mxu0
      %v1859 = vadd.f32 0.0, %v1858
      %v1860 = vpop.f32.mrb[0].mxu0
      %1861 = vdwg.mxu0
      %v1870 = vrot.slane %v1427, 7
      %v1871 = vsel %vm1202, %v1870, %v1355
      %v1872 = vrot.slane %v1499, 6
      %v1873 = vsel %vm1205, %v1872, %v1871
      %v1874 = vrot.slane %v1571, 5
      %v1875 = vsel %vm1208, %v1874, %v1873
      %v1876 = vrot.slane %v1643, 4
      %v1877 = vsel %vm1211, %v1876, %v1875
      %v1878 = vrot.slane %v1715, 3
      %v1879 = vsel %vm1214, %v1878, %v1877
      %v1880 = vrot.slane %v1787, 2
      %v1881 = vsel %vm1217, %v1880, %v1879
      %v1882 = vrot.slane %v1859, 1
      %v1883 = vsel %vm1220, %v1882, %v1881
      %v1885 = vld [vmem:[#allocation12] sm:$0xff]
      %v1886 = vld [vmem:[#allocation12 + $0x8] sm:$0xff]
      %v1887 = vld [vmem:[#allocation12 + $0x10] sm:$0xff]
      %v1888 = vld [vmem:[#allocation12 + $0x18] sm:$0xff]
      %v1889 = vld [vmem:[#allocation12 + $0x20] sm:$0xff]
      %v1890 = vld [vmem:[#allocation12 + $0x28] sm:$0xff]
      %v1891 = vld [vmem:[#allocation12 + $0x30] sm:$0xff]
      %v1892 = vld [vmem:[#allocation12 + $0x38] sm:$0xff]
      %v1893 = vld [vmem:[#allocation12 + $0x40] sm:$0xff]
      %v1894 = vld [vmem:[#allocation12 + $0x48] sm:$0xff]
      %v1895 = vld [vmem:[#allocation12 + $0x50] sm:$0xff]
      %v1896 = vld [vmem:[#allocation12 + $0x58] sm:$0xff]
      %v1897 = vld [vmem:[#allocation12 + $0x60] sm:$0xff]
      %v1898 = vld [vmem:[#allocation12 + $0x68] sm:$0xff]
      %v1899 = vld [vmem:[#allocation12 + $0x70] sm:$0xff]
      %v1900 = vld [vmem:[#allocation12 + $0x78] sm:$0xff]
      %v1901 = vld [vmem:[#allocation12 + $0x80] sm:$0xff]
      %v1902 = vld [vmem:[#allocation12 + $0x88] sm:$0xff]
      %v1903 = vld [vmem:[#allocation12 + $0x90] sm:$0xff]
      %v1904 = vld [vmem:[#allocation12 + $0x98] sm:$0xff]
      %v1905 = vld [vmem:[#allocation12 + $0xa0] sm:$0xff]
      %v1906 = vld [vmem:[#allocation12 + $0xa8] sm:$0xff]
      %v1907 = vld [vmem:[#allocation12 + $0xb0] sm:$0xff]
      %v1908 = vld [vmem:[#allocation12 + $0xb8] sm:$0xff]
      %v1909 = vld [vmem:[#allocation12 + $0xc0] sm:$0xff]
      %v1910 = vld [vmem:[#allocation12 + $0xc8] sm:$0xff]
      %v1911 = vld [vmem:[#allocation12 + $0xd0] sm:$0xff]
      %v1912 = vld [vmem:[#allocation12 + $0xd8] sm:$0xff]
      %v1913 = vld [vmem:[#allocation12 + $0xe0] sm:$0xff]
      %v1914 = vld [vmem:[#allocation12 + $0xe8] sm:$0xff]
      %v1915 = vld [vmem:[#allocation12 + $0xf0] sm:$0xff]
      %v1916 = vld [vmem:[#allocation12 + $0xf8] sm:$0xff]
      %v1917 = vld [vmem:[%s8] sm:$0x1]
      %v1919 = vlaneseq
      %v1920 = vshrl.u32 %v1919, 7
      %v1921 = vsub.s32 0, %v1920
      %v1922 = vrot.slane %v1917, %v1921
      %1924 = vmatprep.subr.mxu0 0.0
      %1925 = vmatpush1.msra.mxu0 %v1885
      %1926 = vmatprep.subr.mxu0 0.0
      %1927 = vmatpush1.msra.mxu0 %v1886
      %1928 = vmatprep.subr.mxu0 0.0
      %1929 = vmatpush1.msra.mxu0 %v1887
      %1930 = vmatprep.subr.mxu0 0.0
      %1931 = vmatpush1.msra.mxu0 %v1888
      %1932 = vmatprep.subr.mxu0 0.0
      %1933 = vmatpush1.msra.mxu0 %v1889
      %1934 = vmatprep.subr.mxu0 0.0
      %1935 = vmatpush1.msra.mxu0 %v1890
      %1936 = vmatprep.subr.mxu0 0.0
      %1937 = vmatpush1.msra.mxu0 %v1891
      %1938 = vmatprep.subr.mxu0 0.0
      %1939 = vmatpush1.msra.mxu0 %v1892
      %1940 = vmatprep.subr.mxu0 0.0
      %1941 = vmatpush1.msra.mxu0 %v1893
      %1942 = vmatprep.subr.mxu0 0.0
      %1943 = vmatpush1.msra.mxu0 %v1894
      %1944 = vmatprep.subr.mxu0 0.0
      %1945 = vmatpush1.msra.mxu0 %v1895
      %1946 = vmatprep.subr.mxu0 0.0
      %1947 = vmatpush1.msra.mxu0 %v1896
      %1948 = vmatprep.subr.mxu0 0.0
      %1949 = vmatpush1.msra.mxu0 %v1897
      %1950 = vmatprep.subr.mxu0 0.0
      %1951 = vmatpush1.msra.mxu0 %v1898
      %1952 = vmatprep.subr.mxu0 0.0
      %1953 = vmatpush1.msra.mxu0 %v1899
      %1954 = vmatprep.subr.mxu0 0.0
      %1955 = vmatpush1.msra.mxu0 %v1900
      %1956 = vmatprep.subr.mxu0 0.0
      %1957 = vmatpush1.msra.mxu0 %v1901
      %1958 = vmatprep.subr.mxu0 0.0
      %1959 = vmatpush1.msra.mxu0 %v1902
      %1960 = vmatprep.subr.mxu0 0.0
      %1961 = vmatpush1.msra.mxu0 %v1903
      %1962 = vmatprep.subr.mxu0 0.0
      %1963 = vmatpush1.msra.mxu0 %v1904
      %1964 = vmatprep.subr.mxu0 0.0
      %1965 = vmatpush1.msra.mxu0 %v1905
      %1966 = vmatprep.subr.mxu0 0.0
      %1967 = vmatpush1.msra.mxu0 %v1906
      %1968 = vmatprep.subr.mxu0 0.0
      %1969 = vmatpush1.msra.mxu0 %v1907
      %1970 = vmatprep.subr.mxu0 0.0
      %1971 = vmatpush1.msra.mxu0 %v1908
      %1972 = vmatprep.subr.mxu0 0.0
      %1973 = vmatpush1.msra.mxu0 %v1909
      %1974 = vmatprep.subr.mxu0 0.0
      %1975 = vmatpush1.msra.mxu0 %v1910
      %1976 = vmatprep.subr.mxu0 0.0
      %1977 = vmatpush1.msra.mxu0 %v1911
      %1978 = vmatprep.subr.mxu0 0.0
      %1979 = vmatpush1.msra.mxu0 %v1912
      %1980 = vmatprep.subr.mxu0 0.0
      %1981 = vmatpush1.msra.mxu0 %v1913
      %1982 = vmatprep.subr.mxu0 0.0
      %1983 = vmatpush1.msra.mxu0 %v1914
      %1984 = vmatprep.subr.mxu0 0.0
      %1985 = vmatpush1.msra.mxu0 %v1915
      %1986 = vmatprep.subr.mxu0 0.0
      %1987 = vmatpush1.msra.mxu0 %v1916
      %1988 = vmatprep.mubr.f32.mxu0 %v1883
      %1989 = vmatmul.mubr.f32.gmra.mrb[0].mxu0 %v562
      %v1990 = vpop.f32.mrb[0].mxu0
      %v1991 = vadd.f32 %v1922, %v1990
      %v1992 = vpop.f32.mrb[0].mxu0
      %1993 = vdwg.mxu0
      %v1994 = vtanh.pop %v1991
      %1995 = vst [vmem:[#allocation2] sm:$0xff] %v1994
    $region77: #{tpu_custom_call.1} parent=1 // pred_fallthru
      _
    %v1996 = vld [vmem:[#allocation2] sm:$0xff]
    %v1997 = vld [vmem:[#allocation14] sm:$0xff]
    %v1998 = vld [vmem:[#allocation14 + $0x8] sm:$0xff]
    %v1999 = vld [vmem:[#allocation14 + $0x10] sm:$0xff]
    %v2000 = vld [vmem:[#allocation14 + $0x18] sm:$0xff]
    %v2001 = vld [vmem:[#allocation14 + $0x20] sm:$0xff]
    %v2002 = vld [vmem:[#allocation14 + $0x28] sm:$0xff]
    %v2003 = vld [vmem:[#allocation14 + $0x30] sm:$0xff]
    %v2004 = vld [vmem:[#allocation14 + $0x38] sm:$0xff]
    %v2005 = vld [vmem:[#allocation14 + $0x40] sm:$0xff]
    %v2006 = vld [vmem:[#allocation14 + $0x48] sm:$0xff]
    %v2007 = vld [vmem:[#allocation14 + $0x50] sm:$0xff]
    %v2008 = vld [vmem:[#allocation14 + $0x58] sm:$0xff]
    %v2009 = vld [vmem:[#allocation14 + $0x60] sm:$0xff]
    %v2010 = vld [vmem:[#allocation14 + $0x68] sm:$0xff]
    %v2011 = vld [vmem:[#allocation14 + $0x70] sm:$0xff]
    %v2012 = vld [vmem:[#allocation14 + $0x78] sm:$0xff]
    %v2013 = vld [vmem:[%s10] sm:$0x1]
    %v2015 = vlaneseq
    %v2016 = vshrl.u32 %v2015, 7
    %v2017 = vsub.s32 0, %v2016
    %v2018 = vrot.slane %v2013, %v2017
    %2020 = vmatprep.subr.mxu0 0.0
    %2021 = vmatpush1.msra.mxu0 %v1997
    %2022 = vmatprep.subr.mxu0 0.0
    %2023 = vmatpush1.msra.mxu0 %v1998
    %2024 = vmatprep.subr.mxu0 0.0
    %2025 = vmatpush1.msra.mxu0 %v1999
    %2026 = vmatprep.subr.mxu0 0.0
    %2027 = vmatpush1.msra.mxu0 %v2000
    %2028 = vmatprep.subr.mxu0 0.0
    %2029 = vmatpush1.msra.mxu0 %v2001
    %2030 = vmatprep.subr.mxu0 0.0
    %2031 = vmatpush1.msra.mxu0 %v2002
    %2032 = vmatprep.subr.mxu0 0.0
    %2033 = vmatpush1.msra.mxu0 %v2003
    %2034 = vmatprep.subr.mxu0 0.0
    %2035 = vmatpush1.msra.mxu0 %v2004
    %2036 = vmatprep.subr.mxu0 0.0
    %2037 = vmatpush1.msra.mxu0 %v2005
    %2038 = vmatprep.subr.mxu0 0.0
    %2039 = vmatpush1.msra.mxu0 %v2006
    %2040 = vmatprep.subr.mxu0 0.0
    %2041 = vmatpush1.msra.mxu0 %v2007
    %2042 = vmatprep.subr.mxu0 0.0
    %2043 = vmatpush1.msra.mxu0 %v2008
    %2044 = vmatprep.subr.mxu0 0.0
    %2045 = vmatpush1.msra.mxu0 %v2009
    %2046 = vmatprep.subr.mxu0 0.0
    %2047 = vmatpush1.msra.mxu0 %v2010
    %2048 = vmatprep.subr.mxu0 0.0
    %2049 = vmatpush1.msra.mxu0 %v2011
    %2050 = vmatprep.subr.mxu0 0.0
    %2051 = vmatpush1.msra.mxu0 %v2012
    %2052 = vmatprep.subr.mxu0 0.0
    %2053 = vmatpush1.msra.mxu0 0.0
    %2054 = vmatprep.subr.mxu0 0.0
    %2055 = vmatpush1.msra.mxu0 0.0
    %2056 = vmatprep.subr.mxu0 0.0
    %2057 = vmatpush1.msra.mxu0 0.0
    %2058 = vmatprep.subr.mxu0 0.0
    %2059 = vmatpush1.msra.mxu0 0.0
    %2060 = vmatprep.subr.mxu0 0.0
    %2061 = vmatpush1.msra.mxu0 0.0
    %2062 = vmatprep.subr.mxu0 0.0
    %2063 = vmatpush1.msra.mxu0 0.0
    %2064 = vmatprep.subr.mxu0 0.0
    %2065 = vmatpush1.msra.mxu0 0.0
    %2066 = vmatprep.subr.mxu0 0.0
    %2067 = vmatpush1.msra.mxu0 0.0
    %2068 = vmatprep.subr.mxu0 0.0
    %2069 = vmatpush1.msra.mxu0 0.0
    %2070 = vmatprep.subr.mxu0 0.0
    %2071 = vmatpush1.msra.mxu0 0.0
    %2072 = vmatprep.subr.mxu0 0.0
    %2073 = vmatpush1.msra.mxu0 0.0
    %2074 = vmatprep.subr.mxu0 0.0
    %2075 = vmatpush1.msra.mxu0 0.0
    %2076 = vmatprep.subr.mxu0 0.0
    %2077 = vmatpush1.msra.mxu0 0.0
    %2078 = vmatprep.subr.mxu0 0.0
    %2079 = vmatpush1.msra.mxu0 0.0
    %2080 = vmatprep.subr.mxu0 0.0
    %2081 = vmatpush1.msra.mxu0 0.0
    %2082 = vmatprep.subr.mxu0 0.0
    %2083 = vmatpush1.msra.mxu0 0.0
    %2084 = vmatprep.mubr.f32.mxu0 0.0
    %2085 = vmatmul.mubr.f32.gmra.mrb[0].mxu0 %v1996
    %v2086 = vpop.f32.mrb[0].mxu0
    %v2087 = vadd.f32 %v2018, %v2086
    %v2088 = vpop.f32.mrb[0].mxu0
    %2089 = vdwg.mxu0
    %2090 = vst [vmem:[#allocation15] sm:$0xff] %v2087
    // Predicated region
    $region78: #{tpu_custom_call.1} parent=1 // pred_check
      _
    $region79: #{tpu_custom_call.1} parent=1 // pred_check_branch
      %2092 = sbr.rel (0) target = $region81
    $region80: #{tpu_custom_call.1} parent=1 // pred_region
      %s2094 = ssub.s32 128, 128
      %2095 = vsyncadd [#allocation5], %s2094
      %s2097 = sshll.u32 [#allocation15], 4
      %s2098 = int_to_ptr.vmem [resolvable:$true] %s2097
      %2100 = dma.vmem_to_hbm [thread:$0]  %s2098, 128, %s11, [#allocation5]
    $region81: #{tpu_custom_call.1} parent=1 // pred_fallthru
      _
    // Predicated region
    $region82: #{tpu_custom_call.1} parent=1 // pred_check
      _
    $region83: #{tpu_custom_call.1} parent=1 // pred_check_branch
      %2102 = sbr.rel (0) target = $region85
    $region84: #{tpu_custom_call.1} parent=1 // pred_region
      %s2104 = ssub.s32 128, 128
      %2105 = vsyncadd [#allocation17], %s2104
      %s2107 = sshll.u32 [#allocation16], 4
      %s2108 = int_to_ptr.vmem [resolvable:$true] %s2107
      %2110 = dma.vmem_to_hbm [thread:$0]  %s2108, 128, %s12, [#allocation17]
    $region85: #{tpu_custom_call.1} parent=1 // pred_fallthru
      _
    // Predicated region
    $region86: #{tpu_custom_call.1} parent=1 // pred_check
      _
    $region87: #{tpu_custom_call.1} parent=1 // pred_check_branch
      %2112 = sbr.rel (0) target = $region89
    $region88: #{tpu_custom_call.1} parent=1 // pred_region
      %2113 = dma.done [#allocation5], 128
    $region89: #{tpu_custom_call.1} parent=1 // pred_fallthru
      _
    // Predicated region
    $region90: #{tpu_custom_call.1} parent=1 // pred_check
      _
    $region91: #{tpu_custom_call.1} parent=1 // pred_check_branch
      %2115 = sbr.rel (0) target = $region93
    $region92: #{tpu_custom_call.1} parent=1 // pred_region
      %2116 = dma.done [#allocation17], 128
    $region93: #{tpu_custom_call.1} parent=1 // pred_fallthru
      _
    %2117 = vsyncpa [#allocation4], 1
    %2118 = vsyncpa [#allocation7], 1
    %2119 = vsyncpa [#allocation10], 1
    %2120 = vsyncpa [#allocation13], 1
    %2121 = vsyncpa [#allocation5], 1
    %2122 = vsyncpa [#allocation17], 1

</llo_original>
